<compile_context>
chip_gen: v7x
topology: tpu7x:2x2x1
jax: 0.10.0
libtpu: 0.0.40
codegen_flags: <defaults>
</compile_context>

<pallas_src>
import functools

import jax
import jax.numpy as jnp
from jax.experimental import pallas as pl
from jax.experimental.pallas import tpu as pltpu

CONV_DTYPE = jnp.bfloat16      # conv matmul input dtype (accumulate in f32)
NB_MAX = 8                     # max samples per conv-stage grid step
VMEM_SPEC = pl.BlockSpec(memory_space=pltpu.MemorySpace.VMEM)


# ----------------------------- Pallas kernels ------------------------------

def _conv_stage_kernel(colsT_ref, w_ref, b_ref, g_ref, bt_ref, o_ref,
                       *, n_real, p_real, p_pad, eps):
    """Fused conv + bias + GroupNorm(groups=1) + ReLU + 2x2 maxpool, NB samples.

    colsT_ref: [NB, CKK, 4*Ppad]  im2col columns, quadrant-folded on the lane
               axis: lane q*Ppad + (ph*PW + pw) holds the column for conv
               output pixel (2*ph + di, 2*pw + dj), q = di*2 + dj; lanes with
               p >= P are zero-padded.
    w_ref:     [OC, CKK]          conv weight (bf16, matmul layout)
    b_ref/g_ref/bt_ref: [OC, 1]   conv bias / GN gamma / GN beta (f32)
    o_ref:     [NB, OC, Ppad]     pooled output (real pixels in lanes [0, P))
    """
    w = w_ref[...]
    b = b_ref[...]
    g = g_ref[...]
    bt = bt_ref[...]
    sum_b = jnp.sum(b)
    sum_b2 = jnp.sum(b * b)
    inv_n = 1.0 / float(n_real)
    cols_per_ch = 4.0 * p_real                      # real conv pixels per channel

    nb = colsT_ref.shape[0]
    for n in range(nb):                             # static unroll over samples
        # One lane-dense matmul covering all 4 pool quadrants.
        z = jnp.dot(w, colsT_ref[n], preferred_element_type=jnp.float32)

        # Single-pass GroupNorm(1, C) statistics.  Padded columns of colsT are
        # zero, so z is exactly 0 there and full-array sums equal sums over the
        # real columns; the per-channel bias contribution is added analytically.
        rs = jnp.sum(z, axis=1, keepdims=True)                      # [OC, 1]
        s1 = jnp.sum(rs) + cols_per_ch * sum_b
        s2 = jnp.sum(z * z) + 2.0 * jnp.sum(b * rs) + cols_per_ch * sum_b2
        mean = s1 * inv_n
        var = s2 * inv_n - mean * mean                              # biased (PyTorch)
        inv = jax.lax.rsqrt(var + eps)

        scale = inv * g                                             # [OC, 1]
        shift = (b - mean) * inv * g + bt                           # [OC, 1]
        y = jnp.maximum(z * scale + shift, 0.0)                     # GN + ReLU

        # 2x2 max-pool == elementwise max over the 4 lane-aligned quadrant slabs.
        pooled = jnp.maximum(
            jnp.maximum(y[:, 0 * p_pad:1 * p_pad], y[:, 1 * p_pad:2 * p_pad]),
            jnp.maximum(y[:, 2 * p_pad:3 * p_pad], y[:, 3 * p_pad:4 * p_pad]))
        o_ref[n] = pooled


def _mlp3_kernel(x_ref, w1_ref, b1_ref, w2_ref, b2_ref, w3_ref, b3_ref, o_ref):
    """Fused fc1 + ReLU + fc2 + ReLU + fc3 (padded to 128-lane widths)."""
    h = jnp.dot(x_ref[...], w1_ref[...],
                preferred_element_type=jnp.float32) + b1_ref[...]
    h = jnp.maximum(h, 0.0)
    h = jnp.dot(h, w2_ref[...], preferred_element_type=jnp.float32) + b2_ref[...]
    h = jnp.maximum(h, 0.0)
    o_ref[...] = (jnp.dot(h, w3_ref[...], preferred_element_type=jnp.float32)
                  + b3_ref[...]).astype(o_ref.dtype)


def _linear_kernel(x_ref, w_ref, b_ref, o_ref):
    o_ref[...] = (jnp.dot(x_ref[...], w_ref[...],
                          preferred_element_type=jnp.float32)
                  + b_ref[...]).astype(o_ref.dtype)


# ------------------------------ kernel wrappers -----------------------------

def _im2col_quadrant_cols(x, k, p_pad):
    """x: [B, C, H, W] -> cols [B, C*k*k, 4*p_pad] (bf16), quadrant-folded lanes.

    cols[b, c*k*k + ki*k + kj, q*p_pad + ph*PW + pw]
        = x[b, c, 2*ph + di + ki, 2*pw + dj + kj],  q = di*2 + dj
    and zero for ph*PW + pw >= PH*PW.  Runs as tiny fused XLA glue under jit.
    """
    B, C, H, W = x.shape
    OH, OW = H - k + 1, W - k + 1
    assert OH % 2 == 0 and OW % 2 == 0, "2x2 pool needs even conv output dims"
    PH, PW = OH // 2, OW // 2
    P = PH * PW
    xc = x.astype(CONV_DTYPE)
    taps = jnp.stack([xc[:, :, i:i + OH, j:j + OW]
                      for i in range(k) for j in range(k)],
                     axis=2)                                  # [B, C, KK, OH, OW]
    quads = jnp.stack([taps[..., di::2, dj::2]
                       for di in range(2) for dj in range(2)],
                      axis=3)                                 # [B, C, KK, 4, PH, PW]
    cols = quads.reshape(B, C * k * k, 4, P)
    cols = jnp.pad(cols, ((0, 0), (0, 0), (0, 0), (0, p_pad - P)))
    return cols.reshape(B, C * k * k, 4 * p_pad), PH, PW


def conv_stage(x, w, b, gamma, beta, *, k, p_pad, eps=1e-5):
    """conv(kxk, valid) + bias + GroupNorm(1) + ReLU + maxpool(2,2).

    x: [B, C, H, W] -> [B, OC, p_pad]  (real pooled pixels in lanes [0, PH*PW))
    """
    B, C, H, W = x.shape
    OC = w.shape[0]
    CKK = C * k * k
    cols, PH, PW = _im2col_quadrant_cols(x, k, p_pad)
    P = PH * PW
    n_real = OC * 4 * P                               # = C_out * OH * OW per sample

    # NB samples per grid step (amortize per-step overhead), but keep >= 2 grid
    # blocks whenever B >= 2 so both v7x TensorCores get work.
    nb = max(1, min(NB_MAX, (B + 1) // 2))
    num_blocks = pl.cdiv(B, nb)
    Bp = num_blocks * nb
    if Bp != B:
        cols = jnp.pad(cols, ((0, Bp - B), (0, 0), (0, 0)))

    out = pl.pallas_call(
        functools.partial(_conv_stage_kernel,
                          n_real=n_real, p_real=P, p_pad=p_pad, eps=eps),
        out_shape=jax.ShapeDtypeStruct((Bp, OC, p_pad), jnp.float32),
        grid=(num_blocks,),
        in_specs=[
            pl.BlockSpec((nb, CKK, 4 * p_pad), lambda i: (i, 0, 0)),
            pl.BlockSpec((OC, CKK), lambda i: (0, 0)),
            pl.BlockSpec((OC, 1), lambda i: (0, 0)),
            pl.BlockSpec((OC, 1), lambda i: (0, 0)),
            pl.BlockSpec((OC, 1), lambda i: (0, 0)),
        ],
        out_specs=pl.BlockSpec((nb, OC, p_pad), lambda i: (i, 0, 0)),
        compiler_params=pltpu.CompilerParams(
            dimension_semantics=("parallel",)),
    )(cols, w, b.reshape(OC, 1), gamma.reshape(OC, 1), beta.reshape(OC, 1))
    return out[:B] if Bp != B else out


def mlp3(x, params):
    """x: [B, 400] -> padded logits [B, 128] (real logits in columns [0, 10))."""
    B = x.shape[0]
    return pl.pallas_call(
        _mlp3_kernel,
        out_shape=jax.ShapeDtypeStruct((B, 128), jnp.float32),
        in_specs=[VMEM_SPEC] * 7,
        out_specs=VMEM_SPEC,
    )(x,
      params["fc1_w"], params["fc1_b"].reshape(1, -1),
      params["fc2_w"], params["fc2_b"].reshape(1, -1),
      params["fc3_w"], params["fc3_b"].reshape(1, -1))


def linear_pad(x, w, b):
    B = x.shape[0]
    N = w.shape[1]
    return pl.pallas_call(
        _linear_kernel,
        out_shape=jax.ShapeDtypeStruct((B, N), jnp.float32),
        in_specs=[VMEM_SPEC] * 3,
        out_specs=VMEM_SPEC,
    )(x, w, b.reshape(1, N))


# ----------------------------- model definition ----------------------------

def init_params(key):
    ks = jax.random.split(key, 10)

    def u(k, shape, fan_in):
        bound = 1.0 / float(fan_in) ** 0.5
        return jax.random.uniform(k, shape, jnp.float32, -bound, bound)

    def pad_fc(w_t, b_real, in_pad, out_pad):
        # torch Linear [out, in] -> matmul-ready [in_pad, out_pad], zero padding.
        in_real, out_real = w_t.shape
        w = jnp.zeros((in_pad, out_pad), jnp.float32).at[:in_real, :out_real].set(w_t)
        bb = jnp.zeros((out_pad,), jnp.float32).at[:out_real].set(b_real)
        return w, bb

    fc1_w, fc1_b = pad_fc(u(ks[4], (400, 120), 400), u(ks[5], (120,), 400), 400, 128)
    fc2_w, fc2_b = pad_fc(u(ks[6], (120, 84), 120), u(ks[7], (84,), 120), 128, 128)
    fc3_w, fc3_b = pad_fc(u(ks[8], (84, 10), 84), u(ks[9], (10,), 84), 128, 128)

    return {
        # conv weights in matmul layout [OC, C*K*K], bf16 for the MXU.
        "conv1_w": u(ks[0], (6, 3 * 25), 3 * 25).astype(CONV_DTYPE),
        "conv1_b": u(ks[1], (6,), 3 * 25),
        "conv2_w": u(ks[2], (16, 6 * 25), 6 * 25).astype(CONV_DTYPE),
        "conv2_b": u(ks[3], (16,), 6 * 25),
        "fc1_w": fc1_w, "fc1_b": fc1_b,
        "fc2_w": fc2_w, "fc2_b": fc2_b,
        "fc3_w": fc3_w, "fc3_b": fc3_b,
        "n1_g": jnp.ones((6,), jnp.float32),
        "n1_b": jnp.zeros((6,), jnp.float32),
        "n2_g": jnp.ones((16,), jnp.float32),
        "n2_b": jnp.zeros((16,), jnp.float32),
    }


@functools.partial(jax.jit, static_argnames=("start_layer_idx",))
def f(params, x, start_layer_idx=None):
    if start_layer_idx == -1:
        # x is the fc2 output, shape [B, 84]; apply fc3 only (pad to 128 lanes).
        xp = jnp.pad(x, ((0, 0), (0, 128 - x.shape[1])))
        return linear_pad(xp, params["fc3_w"], params["fc3_b"])[:, :10]

    B = x.shape[0]
    # stage 1: conv1 -> GN -> ReLU -> pool   [B,3,32,32] -> [B,6,256] (196 real)
    h = conv_stage(x, params["conv1_w"], params["conv1_b"],
                   params["n1_g"], params["n1_b"], k=5, p_pad=256)
    h = h[:, :, :196].reshape(B, 6, 14, 14)
    # stage 2: conv2 -> GN -> ReLU -> pool   -> [B,16,128] (25 real)
    h = conv_stage(h, params["conv2_w"], params["conv2_b"],
                   params["n2_g"], params["n2_b"], k=5, p_pad=128)
    feats = h[:, :, :25].reshape(B, 16 * 5 * 5)      # exact NCHW flatten order
    logits = mlp3(feats, params)                     # [B, 128] padded
    return logits[:, :10]


def forward(params, batch, start_layer_idx=None):
    output = {"target": f(params, batch["data"], start_layer_idx=start_layer_idx)}
    # TODO(synk): `loss_fn` is undefined in the reference module; loss omitted.
    return output


# ----------------------------------- main -----------------------------------

if __name__ == "__main__":
    key = jax.random.PRNGKey(0)
    pkey, xkey = jax.random.split(key)
    params = init_params(pkey)

    # LeNet geometry: 3x32x32 input -> 16*5*5 = 400 flatten (matches input_dim)
    x = jax.random.normal(xkey, (2, 3, 32, 32), dtype=jnp.float32)
    batch = {"data": x}

    out = forward(params, batch)
    logits = jax.block_until_ready(out["target"])
    assert logits.shape == (2, 10) and logits.dtype == jnp.float32
    assert bool(jnp.all(jnp.isfinite(logits)))

    # also exercise the start_layer_idx == -1 path (fc3 only)
    tail_in = jax.random.normal(jax.random.PRNGKey(1), (2, 84), jnp.float32)
    tail = jax.block_until_ready(forward(params, {"data": tail_in}, -1)["target"])
    assert tail.shape == (2, 10)

    print("KERNEL_OK")
</pallas_src>

<mosaic_0001>
module attributes {stable_mosaic.version = 11 : i64} {
  func.func @_conv_stage_kernel(%arg0: i32, %arg1: memref<1x75x1024xbf16, #tpu.memory_space<vmem>>, %arg2: memref<6x75xbf16, #tpu.memory_space<vmem>>, %arg3: memref<6x1xf32, #tpu.memory_space<vmem>>, %arg4: memref<6x1xf32, #tpu.memory_space<vmem>>, %arg5: memref<6x1xf32, #tpu.memory_space<vmem>>, %arg6: memref<1x6x256xf32, #tpu.memory_space<vmem>>) attributes {dimension_semantics = [#tpu.dimension_semantics<parallel>], iteration_bounds = array<i64: 2>, scalar_prefetch = 0 : i64, scratch_operands = 0 : i64, tpu.core_type = #tpu.core_type<tc>, window_params = [{transform_indices = @transform_0, window_bounds = array<i64: 1, 75, 1024>}, {pipeline_mode = #tpu.pipeline_mode<synchronous>, transform_indices = @transform_1, window_bounds = array<i64: 6, 75>}, {pipeline_mode = #tpu.pipeline_mode<synchronous>, transform_indices = @transform_2, window_bounds = array<i64: 6, 1>}, {pipeline_mode = #tpu.pipeline_mode<synchronous>, transform_indices = @transform_3, window_bounds = array<i64: 6, 1>}, {pipeline_mode = #tpu.pipeline_mode<synchronous>, transform_indices = @transform_4, window_bounds = array<i64: 6, 1>}, {transform_indices = @transform_5, window_bounds = array<i64: 1, 6, 256>}]} {
    %c0 = arith.constant 0 : index
    %c0_0 = arith.constant 0 : index
    %0 = vector.load %arg2[%c0, %c0_0] : memref<6x75xbf16, #tpu.memory_space<vmem>>, vector<6x75xbf16>
    %c0_1 = arith.constant 0 : index
    %c0_2 = arith.constant 0 : index
    %1 = vector.load %arg3[%c0_1, %c0_2] : memref<6x1xf32, #tpu.memory_space<vmem>>, vector<6x1xf32>
    %c0_3 = arith.constant 0 : index
    %c0_4 = arith.constant 0 : index
    %2 = vector.load %arg4[%c0_3, %c0_4] : memref<6x1xf32, #tpu.memory_space<vmem>>, vector<6x1xf32>
    %c0_5 = arith.constant 0 : index
    %c0_6 = arith.constant 0 : index
    %3 = vector.load %arg5[%c0_5, %c0_6] : memref<6x1xf32, #tpu.memory_space<vmem>>, vector<6x1xf32>
    %4 = vector.shape_cast %1 : vector<6x1xf32> to vector<1x6x1xf32>
    %cst = arith.constant dense<0.000000e+00> : vector<1xf32>
    %5 = vector.multi_reduction <add>, %4, %cst [1, 2] : vector<1x6x1xf32> to vector<1xf32>
    %6 = vector.shape_cast %5 : vector<1xf32> to vector<1x1x1xf32>
    %7 = vector.extract %6[0, 0, 0] : f32 from vector<1x1x1xf32>
    %8 = arith.mulf %1, %1 : vector<6x1xf32>
    %9 = vector.shape_cast %8 : vector<6x1xf32> to vector<1x6x1xf32>
    %cst_7 = arith.constant dense<0.000000e+00> : vector<1xf32>
    %10 = vector.multi_reduction <add>, %9, %cst_7 [1, 2] : vector<1x6x1xf32> to vector<1xf32>
    %11 = vector.shape_cast %10 : vector<1xf32> to vector<1x1x1xf32>
    %12 = vector.extract %11[0, 0, 0] : f32 from vector<1x1x1xf32>
    %c0_8 = arith.constant 0 : index
    %c0_9 = arith.constant 0 : index
    %c0_10 = arith.constant 0 : index
    %13 = vector.load %arg1[%c0_8, %c0_9, %c0_10] : memref<1x75x1024xbf16, #tpu.memory_space<vmem>>, vector<1x75x1024xbf16>
    %14 = vector.shape_cast %13 : vector<1x75x1024xbf16> to vector<75x1024xbf16>
    %cst_11 = arith.constant dense<0.000000e+00> : vector<6x1024xf32>
    %15 = tpu.matmul %0, %14, %cst_11 {dimension_numbers = #tpu.dot_dimension_numbers<[1], [0], [0], [1], [0, 0, 1, 1], [], []>} : vector<6x75xbf16>, vector<75x1024xbf16>, vector<6x1024xf32> -> vector<6x1024xf32>
    %cst_12 = arith.constant dense<0.000000e+00> : vector<6xf32>
    %16 = vector.multi_reduction <add>, %15, %cst_12 [1] : vector<6x1024xf32> to vector<6xf32>
    %17 = vector.shape_cast %16 : vector<6xf32> to vector<6x1xf32>
    %18 = vector.shape_cast %17 : vector<6x1xf32> to vector<1x6x1xf32>
    %cst_13 = arith.constant dense<0.000000e+00> : vector<1xf32>
    %19 = vector.multi_reduction <add>, %18, %cst_13 [1, 2] : vector<1x6x1xf32> to vector<1xf32>
    %20 = vector.shape_cast %19 : vector<1xf32> to vector<1x1x1xf32>
    %21 = vector.extract %20[0, 0, 0] : f32 from vector<1x1x1xf32>
    %cst_14 = arith.constant 7.840000e+02 : f32
    %22 = arith.mulf %cst_14, %7 : f32
    %23 = arith.addf %21, %22 : f32
    %24 = arith.mulf %15, %15 : vector<6x1024xf32>
    %25 = vector.shape_cast %24 : vector<6x1024xf32> to vector<1x6x1024xf32>
    %cst_15 = arith.constant dense<0.000000e+00> : vector<1xf32>
    %26 = vector.multi_reduction <add>, %25, %cst_15 [1, 2] : vector<1x6x1024xf32> to vector<1xf32>
    %27 = vector.shape_cast %26 : vector<1xf32> to vector<1x1x1xf32>
    %28 = vector.extract %27[0, 0, 0] : f32 from vector<1x1x1xf32>
    %29 = arith.mulf %1, %17 : vector<6x1xf32>
    %30 = vector.shape_cast %29 : vector<6x1xf32> to vector<1x6x1xf32>
    %cst_16 = arith.constant dense<0.000000e+00> : vector<1xf32>
    %31 = vector.multi_reduction <add>, %30, %cst_16 [1, 2] : vector<1x6x1xf32> to vector<1xf32>
    %32 = vector.shape_cast %31 : vector<1xf32> to vector<1x1x1xf32>
    %33 = vector.extract %32[0, 0, 0] : f32 from vector<1x1x1xf32>
    %cst_17 = arith.constant 2.000000e+00 : f32
    %34 = arith.mulf %cst_17, %33 : f32
    %35 = arith.addf %28, %34 : f32
    %cst_18 = arith.constant 7.840000e+02 : f32
    %36 = arith.mulf %cst_18, %12 : f32
    %37 = arith.addf %35, %36 : f32
    %cst_19 = arith.constant 2.1258503E-4 : f32
    %38 = arith.mulf %23, %cst_19 : f32
    %cst_20 = arith.constant 2.1258503E-4 : f32
    %39 = arith.mulf %37, %cst_20 : f32
    %40 = arith.mulf %38, %38 : f32
    %41 = arith.subf %39, %40 : f32
    %cst_21 = arith.constant 9.99999974E-6 : f32
    %42 = arith.addf %41, %cst_21 : f32
    %43 = math.rsqrt %42 : f32
    %44 = vector.broadcast %43 : f32 to vector<6x1xf32>
    %45 = arith.mulf %44, %2 : vector<6x1xf32>
    %46 = vector.broadcast %38 : f32 to vector<6x1xf32>
    %47 = arith.subf %1, %46 : vector<6x1xf32>
    %48 = vector.broadcast %43 : f32 to vector<6x1xf32>
    %49 = arith.mulf %47, %48 : vector<6x1xf32>
    %50 = arith.mulf %49, %2 : vector<6x1xf32>
    %51 = arith.addf %50, %3 : vector<6x1xf32>
    %52 = vector.broadcast %45 : vector<6x1xf32> to vector<6x1024xf32>
    %53 = arith.mulf %15, %52 : vector<6x1024xf32>
    %54 = vector.broadcast %51 : vector<6x1xf32> to vector<6x1024xf32>
    %55 = arith.addf %53, %54 : vector<6x1024xf32>
    %cst_22 = arith.constant 0.000000e+00 : f32
    %56 = vector.broadcast %cst_22 : f32 to vector<6x1024xf32>
    %57 = arith.maximumf %55, %56 : vector<6x1024xf32>
    %58 = vector.extract_strided_slice %57 {offsets = [0, 0], sizes = [6, 256], strides = [1, 1]} : vector<6x1024xf32> to vector<6x256xf32>
    %59 = vector.extract_strided_slice %57 {offsets = [0, 256], sizes = [6, 256], strides = [1, 1]} : vector<6x1024xf32> to vector<6x256xf32>
    %60 = arith.maximumf %58, %59 : vector<6x256xf32>
    %61 = vector.extract_strided_slice %57 {offsets = [0, 512], sizes = [6, 256], strides = [1, 1]} : vector<6x1024xf32> to vector<6x256xf32>
    %62 = vector.extract_strided_slice %57 {offsets = [0, 768], sizes = [6, 256], strides = [1, 1]} : vector<6x1024xf32> to vector<6x256xf32>
    %63 = arith.maximumf %61, %62 : vector<6x256xf32>
    %64 = arith.maximumf %60, %63 : vector<6x256xf32>
    %c0_23 = arith.constant 0 : index
    %c0_24 = arith.constant 0 : index
    %c0_25 = arith.constant 0 : index
    %65 = vector.load %arg6[%c0_23, %c0_24, %c0_25] : memref<1x6x256xf32, #tpu.memory_space<vmem>>, vector<1x6x256xf32>
    %66 = vector.shape_cast %65 : vector<1x6x256xf32> to vector<6x256xf32>
    %67 = vector.shape_cast %64 : vector<6x256xf32> to vector<1x6x256xf32>
    tpu.vector_store %arg6[%c0_23, %c0_24, %c0_25], %67 {strides = array<i32>} : memref<1x6x256xf32, #tpu.memory_space<vmem>>, vector<1x6x256xf32>,
    return
  }
  func.func @transform_0(%arg0: i32) -> (i32, i32, i32) {
    %c0_i32 = arith.constant 0 : i32
    %c0_i32_0 = arith.constant 0 : i32
    %c0_i32_1 = arith.constant 0 : i32
    return %arg0, %c0_i32, %c0_i32_0 : i32, i32, i32
  }
  func.func @transform_1(%arg0: i32) -> (i32, i32) {
    %c0_i32 = arith.constant 0 : i32
    %c0_i32_0 = arith.constant 0 : i32
    %c0_i32_1 = arith.constant 0 : i32
    return %c0_i32, %c0_i32_0 : i32, i32
  }
  func.func @transform_2(%arg0: i32) -> (i32, i32) {
    %c0_i32 = arith.constant 0 : i32
    %c0_i32_0 = arith.constant 0 : i32
    %c0_i32_1 = arith.constant 0 : i32
    return %c0_i32, %c0_i32_0 : i32, i32
  }
  func.func @transform_3(%arg0: i32) -> (i32, i32) {
    %c0_i32 = arith.constant 0 : i32
    %c0_i32_0 = arith.constant 0 : i32
    %c0_i32_1 = arith.constant 0 : i32
    return %c0_i32, %c0_i32_0 : i32, i32
  }
  func.func @transform_4(%arg0: i32) -> (i32, i32) {
    %c0_i32 = arith.constant 0 : i32
    %c0_i32_0 = arith.constant 0 : i32
    %c0_i32_1 = arith.constant 0 : i32
    return %c0_i32, %c0_i32_0 : i32, i32
  }
  func.func @transform_5(%arg0: i32) -> (i32, i32, i32) {
    %c0_i32 = arith.constant 0 : i32
    %c0_i32_0 = arith.constant 0 : i32
    %c0_i32_1 = arith.constant 0 : i32
    return %arg0, %c0_i32, %c0_i32_0 : i32, i32, i32
  }
}

module attributes {stable_mosaic.version = 11 : i64} {
  func.func @_conv_stage_kernel(%arg0: i32, %arg1: memref<1x150x512xbf16, #tpu.memory_space<vmem>>, %arg2: memref<16x150xbf16, #tpu.memory_space<vmem>>, %arg3: memref<16x1xf32, #tpu.memory_space<vmem>>, %arg4: memref<16x1xf32, #tpu.memory_space<vmem>>, %arg5: memref<16x1xf32, #tpu.memory_space<vmem>>, %arg6: memref<1x16x128xf32, #tpu.memory_space<vmem>>) attributes {dimension_semantics = [#tpu.dimension_semantics<parallel>], iteration_bounds = array<i64: 2>, scalar_prefetch = 0 : i64, scratch_operands = 0 : i64, tpu.core_type = #tpu.core_type<tc>, window_params = [{transform_indices = @transform_0, window_bounds = array<i64: 1, 150, 512>}, {pipeline_mode = #tpu.pipeline_mode<synchronous>, transform_indices = @transform_1, window_bounds = array<i64: 16, 150>}, {pipeline_mode = #tpu.pipeline_mode<synchronous>, transform_indices = @transform_2, window_bounds = array<i64: 16, 1>}, {pipeline_mode = #tpu.pipeline_mode<synchronous>, transform_indices = @transform_3, window_bounds = array<i64: 16, 1>}, {pipeline_mode = #tpu.pipeline_mode<synchronous>, transform_indices = @transform_4, window_bounds = array<i64: 16, 1>}, {transform_indices = @transform_5, window_bounds = array<i64: 1, 16, 128>}]} {
    %c0 = arith.constant 0 : index
    %c0_0 = arith.constant 0 : index
    %0 = vector.load %arg2[%c0, %c0_0] : memref<16x150xbf16, #tpu.memory_space<vmem>>, vector<16x150xbf16>
    %c0_1 = arith.constant 0 : index
    %c0_2 = arith.constant 0 : index
    %1 = vector.load %arg3[%c0_1, %c0_2] : memref<16x1xf32, #tpu.memory_space<vmem>>, vector<16x1xf32>
    %c0_3 = arith.constant 0 : index
    %c0_4 = arith.constant 0 : index
    %2 = vector.load %arg4[%c0_3, %c0_4] : memref<16x1xf32, #tpu.memory_space<vmem>>, vector<16x1xf32>
    %c0_5 = arith.constant 0 : index
    %c0_6 = arith.constant 0 : index
    %3 = vector.load %arg5[%c0_5, %c0_6] : memref<16x1xf32, #tpu.memory_space<vmem>>, vector<16x1xf32>
    %4 = vector.shape_cast %1 : vector<16x1xf32> to vector<1x16x1xf32>
    %cst = arith.constant dense<0.000000e+00> : vector<1xf32>
    %5 = vector.multi_reduction <add>, %4, %cst [1, 2] : vector<1x16x1xf32> to vector<1xf32>
    %6 = vector.shape_cast %5 : vector<1xf32> to vector<1x1x1xf32>
    %7 = vector.extract %6[0, 0, 0] : f32 from vector<1x1x1xf32>
    %8 = arith.mulf %1, %1 : vector<16x1xf32>
    %9 = vector.shape_cast %8 : vector<16x1xf32> to vector<1x16x1xf32>
    %cst_7 = arith.constant dense<0.000000e+00> : vector<1xf32>
    %10 = vector.multi_reduction <add>, %9, %cst_7 [1, 2] : vector<1x16x1xf32> to vector<1xf32>
    %11 = vector.shape_cast %10 : vector<1xf32> to vector<1x1x1xf32>
    %12 = vector.extract %11[0, 0, 0] : f32 from vector<1x1x1xf32>
    %c0_8 = arith.constant 0 : index
    %c0_9 = arith.constant 0 : index
    %c0_10 = arith.constant 0 : index
    %13 = vector.load %arg1[%c0_8, %c0_9, %c0_10] : memref<1x150x512xbf16, #tpu.memory_space<vmem>>, vector<1x150x512xbf16>
    %14 = vector.shape_cast %13 : vector<1x150x512xbf16> to vector<150x512xbf16>
    %cst_11 = arith.constant dense<0.000000e+00> : vector<16x512xf32>
    %15 = tpu.matmul %0, %14, %cst_11 {dimension_numbers = #tpu.dot_dimension_numbers<[1], [0], [0], [1], [0, 0, 1, 1], [], []>} : vector<16x150xbf16>, vector<150x512xbf16>, vector<16x512xf32> -> vector<16x512xf32>
    %cst_12 = arith.constant dense<0.000000e+00> : vector<16xf32>
    %16 = vector.multi_reduction <add>, %15, %cst_12 [1] : vector<16x512xf32> to vector<16xf32>
    %17 = vector.shape_cast %16 : vector<16xf32> to vector<16x1xf32>
    %18 = vector.shape_cast %17 : vector<16x1xf32> to vector<1x16x1xf32>
    %cst_13 = arith.constant dense<0.000000e+00> : vector<1xf32>
    %19 = vector.multi_reduction <add>, %18, %cst_13 [1, 2] : vector<1x16x1xf32> to vector<1xf32>
    %20 = vector.shape_cast %19 : vector<1xf32> to vector<1x1x1xf32>
    %21 = vector.extract %20[0, 0, 0] : f32 from vector<1x1x1xf32>
    %cst_14 = arith.constant 1.000000e+02 : f32
    %22 = arith.mulf %cst_14, %7 : f32
    %23 = arith.addf %21, %22 : f32
    %24 = arith.mulf %15, %15 : vector<16x512xf32>
    %25 = vector.shape_cast %24 : vector<16x512xf32> to vector<1x16x512xf32>
    %cst_15 = arith.constant dense<0.000000e+00> : vector<1xf32>
    %26 = vector.multi_reduction <add>, %25, %cst_15 [1, 2] : vector<1x16x512xf32> to vector<1xf32>
    %27 = vector.shape_cast %26 : vector<1xf32> to vector<1x1x1xf32>
    %28 = vector.extract %27[0, 0, 0] : f32 from vector<1x1x1xf32>
    %29 = arith.mulf %1, %17 : vector<16x1xf32>
    %30 = vector.shape_cast %29 : vector<16x1xf32> to vector<1x16x1xf32>
    %cst_16 = arith.constant dense<0.000000e+00> : vector<1xf32>
    %31 = vector.multi_reduction <add>, %30, %cst_16 [1, 2] : vector<1x16x1xf32> to vector<1xf32>
    %32 = vector.shape_cast %31 : vector<1xf32> to vector<1x1x1xf32>
    %33 = vector.extract %32[0, 0, 0] : f32 from vector<1x1x1xf32>
    %cst_17 = arith.constant 2.000000e+00 : f32
    %34 = arith.mulf %cst_17, %33 : f32
    %35 = arith.addf %28, %34 : f32
    %cst_18 = arith.constant 1.000000e+02 : f32
    %36 = arith.mulf %cst_18, %12 : f32
    %37 = arith.addf %35, %36 : f32
    %cst_19 = arith.constant 6.250000e-04 : f32
    %38 = arith.mulf %23, %cst_19 : f32
    %cst_20 = arith.constant 6.250000e-04 : f32
    %39 = arith.mulf %37, %cst_20 : f32
    %40 = arith.mulf %38, %38 : f32
    %41 = arith.subf %39, %40 : f32
    %cst_21 = arith.constant 9.99999974E-6 : f32
    %42 = arith.addf %41, %cst_21 : f32
    %43 = math.rsqrt %42 : f32
    %44 = vector.broadcast %43 : f32 to vector<16x1xf32>
    %45 = arith.mulf %44, %2 : vector<16x1xf32>
    %46 = vector.broadcast %38 : f32 to vector<16x1xf32>
    %47 = arith.subf %1, %46 : vector<16x1xf32>
    %48 = vector.broadcast %43 : f32 to vector<16x1xf32>
    %49 = arith.mulf %47, %48 : vector<16x1xf32>
    %50 = arith.mulf %49, %2 : vector<16x1xf32>
    %51 = arith.addf %50, %3 : vector<16x1xf32>
    %52 = vector.broadcast %45 : vector<16x1xf32> to vector<16x512xf32>
    %53 = arith.mulf %15, %52 : vector<16x512xf32>
    %54 = vector.broadcast %51 : vector<16x1xf32> to vector<16x512xf32>
    %55 = arith.addf %53, %54 : vector<16x512xf32>
    %cst_22 = arith.constant 0.000000e+00 : f32
    %56 = vector.broadcast %cst_22 : f32 to vector<16x512xf32>
    %57 = arith.maximumf %55, %56 : vector<16x512xf32>
    %58 = vector.extract_strided_slice %57 {offsets = [0, 0], sizes = [16, 128], strides = [1, 1]} : vector<16x512xf32> to vector<16x128xf32>
    %59 = vector.extract_strided_slice %57 {offsets = [0, 128], sizes = [16, 128], strides = [1, 1]} : vector<16x512xf32> to vector<16x128xf32>
    %60 = arith.maximumf %58, %59 : vector<16x128xf32>
    %61 = vector.extract_strided_slice %57 {offsets = [0, 256], sizes = [16, 128], strides = [1, 1]} : vector<16x512xf32> to vector<16x128xf32>
    %62 = vector.extract_strided_slice %57 {offsets = [0, 384], sizes = [16, 128], strides = [1, 1]} : vector<16x512xf32> to vector<16x128xf32>
    %63 = arith.maximumf %61, %62 : vector<16x128xf32>
    %64 = arith.maximumf %60, %63 : vector<16x128xf32>
    %c0_23 = arith.constant 0 : index
    %c0_24 = arith.constant 0 : index
    %c0_25 = arith.constant 0 : index
    %65 = vector.load %arg6[%c0_23, %c0_24, %c0_25] : memref<1x16x128xf32, #tpu.memory_space<vmem>>, vector<1x16x128xf32>
    %66 = vector.shape_cast %65 : vector<1x16x128xf32> to vector<16x128xf32>
    %67 = vector.shape_cast %64 : vector<16x128xf32> to vector<1x16x128xf32>
    tpu.vector_store %arg6[%c0_23, %c0_24, %c0_25], %67 {strides = array<i32>} : memref<1x16x128xf32, #tpu.memory_space<vmem>>, vector<1x16x128xf32>,
    return
  }
  func.func @transform_0(%arg0: i32) -> (i32, i32, i32) {
    %c0_i32 = arith.constant 0 : i32
    %c0_i32_0 = arith.constant 0 : i32
    %c0_i32_1 = arith.constant 0 : i32
    return %arg0, %c0_i32, %c0_i32_0 : i32, i32, i32
  }
  func.func @transform_1(%arg0: i32) -> (i32, i32) {
    %c0_i32 = arith.constant 0 : i32
    %c0_i32_0 = arith.constant 0 : i32
    %c0_i32_1 = arith.constant 0 : i32
    return %c0_i32, %c0_i32_0 : i32, i32
  }
  func.func @transform_2(%arg0: i32) -> (i32, i32) {
    %c0_i32 = arith.constant 0 : i32
    %c0_i32_0 = arith.constant 0 : i32
    %c0_i32_1 = arith.constant 0 : i32
    return %c0_i32, %c0_i32_0 : i32, i32
  }
  func.func @transform_3(%arg0: i32) -> (i32, i32) {
    %c0_i32 = arith.constant 0 : i32
    %c0_i32_0 = arith.constant 0 : i32
    %c0_i32_1 = arith.constant 0 : i32
    return %c0_i32, %c0_i32_0 : i32, i32
  }
  func.func @transform_4(%arg0: i32) -> (i32, i32) {
    %c0_i32 = arith.constant 0 : i32
    %c0_i32_0 = arith.constant 0 : i32
    %c0_i32_1 = arith.constant 0 : i32
    return %c0_i32, %c0_i32_0 : i32, i32
  }
  func.func @transform_5(%arg0: i32) -> (i32, i32, i32) {
    %c0_i32 = arith.constant 0 : i32
    %c0_i32_0 = arith.constant 0 : i32
    %c0_i32_1 = arith.constant 0 : i32
    return %arg0, %c0_i32, %c0_i32_0 : i32, i32, i32
  }
}

module attributes {stable_mosaic.version = 11 : i64} {
  func.func @_mlp3_kernel(%arg0: memref<2x400xf32, #tpu.memory_space<vmem>>, %arg1: memref<400x128xf32, #tpu.memory_space<vmem>>, %arg2: memref<1x128xf32, #tpu.memory_space<vmem>>, %arg3: memref<128x128xf32, #tpu.memory_space<vmem>>, %arg4: memref<1x128xf32, #tpu.memory_space<vmem>>, %arg5: memref<128x128xf32, #tpu.memory_space<vmem>>, %arg6: memref<1x128xf32, #tpu.memory_space<vmem>>, %arg7: memref<2x128xf32, #tpu.memory_space<vmem>>) attributes {dimension_semantics = [], scalar_prefetch = 0 : i64, scratch_operands = 0 : i64, tpu.core_type = #tpu.core_type<tc>} {
    %c0 = arith.constant 0 : index
    %c0_0 = arith.constant 0 : index
    %0 = vector.load %arg0[%c0, %c0_0] : memref<2x400xf32, #tpu.memory_space<vmem>>, vector<2x400xf32>
    %c0_1 = arith.constant 0 : index
    %c0_2 = arith.constant 0 : index
    %1 = vector.load %arg1[%c0_1, %c0_2] : memref<400x128xf32, #tpu.memory_space<vmem>>, vector<400x128xf32>
    %cst = arith.constant dense<0.000000e+00> : vector<2x128xf32>
    %2 = tpu.matmul %0, %1, %cst {dimension_numbers = #tpu.dot_dimension_numbers<[1], [0], [0], [1], [0, 0, 1, 1], [], []>} : vector<2x400xf32>, vector<400x128xf32>, vector<2x128xf32> -> vector<2x128xf32>
    %c0_3 = arith.constant 0 : index
    %c0_4 = arith.constant 0 : index
    %3 = vector.load %arg2[%c0_3, %c0_4] : memref<1x128xf32, #tpu.memory_space<vmem>>, vector<1x128xf32>
    %4 = vector.broadcast %3 : vector<1x128xf32> to vector<2x128xf32>
    %5 = arith.addf %2, %4 : vector<2x128xf32>
    %cst_5 = arith.constant 0.000000e+00 : f32
    %6 = vector.broadcast %cst_5 : f32 to vector<2x128xf32>
    %7 = arith.maximumf %5, %6 : vector<2x128xf32>
    %c0_6 = arith.constant 0 : index
    %c0_7 = arith.constant 0 : index
    %8 = vector.load %arg3[%c0_6, %c0_7] : memref<128x128xf32, #tpu.memory_space<vmem>>, vector<128x128xf32>
    %cst_8 = arith.constant dense<0.000000e+00> : vector<2x128xf32>
    %9 = tpu.matmul %7, %8, %cst_8 {dimension_numbers = #tpu.dot_dimension_numbers<[1], [0], [0], [1], [0, 0, 1, 1], [], []>} : vector<2x128xf32>, vector<128x128xf32>, vector<2x128xf32> -> vector<2x128xf32>
    %c0_9 = arith.constant 0 : index
    %c0_10 = arith.constant 0 : index
    %10 = vector.load %arg4[%c0_9, %c0_10] : memref<1x128xf32, #tpu.memory_space<vmem>>, vector<1x128xf32>
    %11 = vector.broadcast %10 : vector<1x128xf32> to vector<2x128xf32>
    %12 = arith.addf %9, %11 : vector<2x128xf32>
    %cst_11 = arith.constant 0.000000e+00 : f32
    %13 = vector.broadcast %cst_11 : f32 to vector<2x128xf32>
    %14 = arith.maximumf %12, %13 : vector<2x128xf32>
    %c0_12 = arith.constant 0 : index
    %c0_13 = arith.constant 0 : index
    %15 = vector.load %arg5[%c0_12, %c0_13] : memref<128x128xf32, #tpu.memory_space<vmem>>, vector<128x128xf32>
    %cst_14 = arith.constant dense<0.000000e+00> : vector<2x128xf32>
    %16 = tpu.matmul %14, %15, %cst_14 {dimension_numbers = #tpu.dot_dimension_numbers<[1], [0], [0], [1], [0, 0, 1, 1], [], []>} : vector<2x128xf32>, vector<128x128xf32>, vector<2x128xf32> -> vector<2x128xf32>
    %c0_15 = arith.constant 0 : index
    %c0_16 = arith.constant 0 : index
    %17 = vector.load %arg6[%c0_15, %c0_16] : memref<1x128xf32, #tpu.memory_space<vmem>>, vector<1x128xf32>
    %18 = vector.broadcast %17 : vector<1x128xf32> to vector<2x128xf32>
    %19 = arith.addf %16, %18 : vector<2x128xf32>
    %c0_17 = arith.constant 0 : index
    %c0_18 = arith.constant 0 : index
    %20 = vector.load %arg7[%c0_17, %c0_18] : memref<2x128xf32, #tpu.memory_space<vmem>>, vector<2x128xf32>
    tpu.vector_store %arg7[%c0_17, %c0_18], %19 {strides = array<i32>} : memref<2x128xf32, #tpu.memory_space<vmem>>, vector<2x128xf32>,
    return
  }
}

</mosaic_0001>

<llo_original>
// kernel: f.3
$region0: #{f.3}
  #allocation0 [shape = 'u32[]', space=smem, size = 0x4, offset = 0x4, fixed_abs, tag = 'smem constant byte address 0x4 - core index']
  #allocation1 [shape = 'u32[144,128]{1,0:T(1,128)}', space=vmem, size = 0x12000, scoped, tag = 'internal scratch']
  %s0 = inlined_call_operand.vmem [shape: bf16[2,75,1024], index: 0, kind: input, shape index: {}]
  %s1 = inlined_call_operand.vmem [shape: bf16[6,75], index: 1, kind: input, shape index: {}]
  %s2 = inlined_call_operand.vmem [shape: f32[6,1], index: 2, kind: input, shape index: {}]
  %s3 = inlined_call_operand.vmem [shape: f32[6,1], index: 3, kind: input, shape index: {}]
  %s4 = inlined_call_operand.vmem [shape: f32[6,1], index: 4, kind: input, shape index: {}]
  %s5 = inlined_call_operand.vmem [shape: f32[2,6,256], index: 5, kind: output, shape index: {}]
  %s6 = sld [smem:[#allocation0]]
  $region53: #{f.3} parent=0
    _
  %s8 = ssub.s32 1, %s6
  %s9 = scalar_select 0, %s8, %s6
  loop: start=0, step=1, limit=4
  $region2: #{f.3} parent=0 // loop_pre_header
    _
  $region3: #{f.3} parent=0 // loop_header
    %s11 = sphi 0, %s15
    %p12 = scmp.ge.s32.totalorder %s11, 4
    %s21 = sphi 0, %s23
    %s24 = sphi 0, %s21
    %s25 = sphi 0, %s24
    %s41 = sphi 0, %s25
    %s45 = sphi 0, %s45
    %s47 = sphi 0, %s45
    %s48 = sphi 0, %s47
    %s62 = sphi 0, %s48
    %s66 = sphi 0, %s66
    %s68 = sphi 0, %s66
    %s69 = sphi 0, %s68
    %s83 = sphi 0, %s69
    %s87 = sphi 0, %s87
    %s89 = sphi 0, %s87
    %s90 = sphi 0, %s89
    %s104 = sphi 0, %s90
    %s108 = sphi 0, %s108
    %s110 = sphi 0, %s108
    %s111 = sphi 0, %s110
    %s125 = sphi 0, %s111
    %s131 = sphi 0, %s133
    %s134 = sphi 0, %s131
    %s135 = sphi 0, %s134
    %s151 = sphi 0, %s135
  $region4: #{f.3} parent=0 // loop_header_branch
    %14 = sbr.rel (%p12) target = $region8
  $region5: #{f.3} parent=0 // loop_body
    %s16 = ssub.s32 %s11, 1
    %s17 = ssub.s32 %s11, 2
    %s18 = sadd.s32 %s11, 1
    %s19 = ssub.s32 %s11, %s18
    %p20 = scmp.eq.s32.totalorder %s19, 0
    %s22 = sadd.s32 %s21, 1
    %s23 = scalar_select %p20, %s21, %s22
    %p26 = pneg %p20
    %p27 = scmp.eq.s32.totalorder %s11, 1
    %p28 = por %p26, %p27
    %p29 = scmp.ne.s32.totalorder %s21, %s24
    %p30 = scmp.eq.s32.totalorder %s11, 0
    %p31 = por %p29, %p30
    %p32 = scmp.ne.s32.totalorder %s21, %s24
    %p33 = scmp.eq.s32.totalorder %s16, 1
    %p34 = por %p32, %p33
    %p35 = scmp.ne.s32.totalorder %s24, %s25
    %p36 = scmp.eq.s32.totalorder %s16, 0
    %p37 = por %p35, %p36
    %p38 = scmp.ne.s32.totalorder %s24, %s25
    %p39 = scmp.eq.s32.totalorder %s17, 1
    %p40 = por %p38, %p39
    %p42 = scmp.ne.s32.totalorder %s25, %s41
    %p43 = scmp.eq.s32.totalorder %s17, 0
    %p44 = por %p42, %p43
    %s46 = sadd.s32 %s45, 1
    %p49 = scmp.eq.s32.totalorder %s11, 1
    %p50 = scmp.ne.s32.totalorder %s45, %s47
    %p51 = scmp.eq.s32.totalorder %s11, 0
    %p52 = por %p50, %p51
    %p53 = scmp.ne.s32.totalorder %s45, %s47
    %p54 = scmp.eq.s32.totalorder %s16, 1
    %p55 = por %p53, %p54
    %p56 = scmp.ne.s32.totalorder %s47, %s48
    %p57 = scmp.eq.s32.totalorder %s16, 0
    %p58 = por %p56, %p57
    %p59 = scmp.ne.s32.totalorder %s47, %s48
    %p60 = scmp.eq.s32.totalorder %s17, 1
    %p61 = por %p59, %p60
    %p63 = scmp.ne.s32.totalorder %s48, %s62
    %p64 = scmp.eq.s32.totalorder %s17, 0
    %p65 = por %p63, %p64
    %s67 = sadd.s32 %s66, 1
    %p70 = scmp.eq.s32.totalorder %s11, 1
    %p71 = scmp.ne.s32.totalorder %s66, %s68
    %p72 = scmp.eq.s32.totalorder %s11, 0
    %p73 = por %p71, %p72
    %p74 = scmp.ne.s32.totalorder %s66, %s68
    %p75 = scmp.eq.s32.totalorder %s16, 1
    %p76 = por %p74, %p75
    %p77 = scmp.ne.s32.totalorder %s68, %s69
    %p78 = scmp.eq.s32.totalorder %s16, 0
    %p79 = por %p77, %p78
    %p80 = scmp.ne.s32.totalorder %s68, %s69
    %p81 = scmp.eq.s32.totalorder %s17, 1
    %p82 = por %p80, %p81
    %p84 = scmp.ne.s32.totalorder %s69, %s83
    %p85 = scmp.eq.s32.totalorder %s17, 0
    %p86 = por %p84, %p85
    %s88 = sadd.s32 %s87, 1
    %p91 = scmp.eq.s32.totalorder %s11, 1
    %p92 = scmp.ne.s32.totalorder %s87, %s89
    %p93 = scmp.eq.s32.totalorder %s11, 0
    %p94 = por %p92, %p93
    %p95 = scmp.ne.s32.totalorder %s87, %s89
    %p96 = scmp.eq.s32.totalorder %s16, 1
    %p97 = por %p95, %p96
    %p98 = scmp.ne.s32.totalorder %s89, %s90
    %p99 = scmp.eq.s32.totalorder %s16, 0
    %p100 = por %p98, %p99
    %p101 = scmp.ne.s32.totalorder %s89, %s90
    %p102 = scmp.eq.s32.totalorder %s17, 1
    %p103 = por %p101, %p102
    %p105 = scmp.ne.s32.totalorder %s90, %s104
    %p106 = scmp.eq.s32.totalorder %s17, 0
    %p107 = por %p105, %p106
    %s109 = sadd.s32 %s108, 1
    %p112 = scmp.eq.s32.totalorder %s11, 1
    %p113 = scmp.ne.s32.totalorder %s108, %s110
    %p114 = scmp.eq.s32.totalorder %s11, 0
    %p115 = por %p113, %p114
    %p116 = scmp.ne.s32.totalorder %s108, %s110
    %p117 = scmp.eq.s32.totalorder %s16, 1
    %p118 = por %p116, %p117
    %p119 = scmp.ne.s32.totalorder %s110, %s111
    %p120 = scmp.eq.s32.totalorder %s16, 0
    %p121 = por %p119, %p120
    %p122 = scmp.ne.s32.totalorder %s110, %s111
    %p123 = scmp.eq.s32.totalorder %s17, 1
    %p124 = por %p122, %p123
    %p126 = scmp.ne.s32.totalorder %s111, %s125
    %p127 = scmp.eq.s32.totalorder %s17, 0
    %p128 = por %p126, %p127
    %s129 = ssub.s32 %s11, %s18
    %p130 = scmp.eq.s32.totalorder %s129, 0
    %s132 = sadd.s32 %s131, 1
    %s133 = scalar_select %p130, %s131, %s132
    %p136 = pneg %p130
    %p137 = scmp.eq.s32.totalorder %s11, 1
    %p138 = por %p136, %p137
    %p139 = scmp.ne.s32.totalorder %s131, %s134
    %p140 = scmp.eq.s32.totalorder %s11, 0
    %p141 = por %p139, %p140
    %p142 = scmp.ne.s32.totalorder %s131, %s134
    %p143 = scmp.eq.s32.totalorder %s16, 1
    %p144 = por %p142, %p143
    %p145 = scmp.ne.s32.totalorder %s134, %s135
    %p146 = scmp.eq.s32.totalorder %s16, 0
    %p147 = por %p145, %p146
    %p148 = scmp.ne.s32.totalorder %s134, %s135
    %p149 = scmp.eq.s32.totalorder %s17, 1
    %p150 = por %p148, %p149
    %p152 = scmp.ne.s32.totalorder %s135, %s151
    %p153 = scmp.eq.s32.totalorder %s17, 0
    %p154 = por %p152, %p153
    %p155 = scmp.le.s32.totalorder 1, %s11
    %p156 = scmp.lt.s32.totalorder %s11, 3
    %p157 = pnand %p155, %p156
    %p158 = pneg %p157
    // Predicated region
    $region9: #{f.3} parent=5 // pred_check
      _
    $region10: #{f.3} parent=5 // pred_check_branch
      %160 = sbr.rel (%p157) target = $region12
    $region11: #{f.3} parent=5 // pred_region
      %s161 = ssub.s32 %s11, 1
      // Predicated region
      $region13: #{f.3} parent=11 // pred_check
        %p162 = pneg %p58
      $region14: #{f.3} parent=11 // pred_check_branch
        %164 = sbr.rel (%p162) target = $region16
      $region15: #{f.3} parent=11 // pred_region
        _
      $region16: #{f.3} parent=11 // pred_fallthru
        _
      // Predicated region
      $region17: #{f.3} parent=11 // pred_check
        %p165 = pneg %p79
      $region18: #{f.3} parent=11 // pred_check_branch
        %167 = sbr.rel (%p165) target = $region20
      $region19: #{f.3} parent=11 // pred_region
        _
      $region20: #{f.3} parent=11 // pred_fallthru
        _
      // Predicated region
      $region21: #{f.3} parent=11 // pred_check
        %p168 = pneg %p100
      $region22: #{f.3} parent=11 // pred_check_branch
        %170 = sbr.rel (%p168) target = $region24
      $region23: #{f.3} parent=11 // pred_region
        _
      $region24: #{f.3} parent=11 // pred_fallthru
        _
      // Predicated region
      $region25: #{f.3} parent=11 // pred_check
        %p171 = pneg %p121
      $region26: #{f.3} parent=11 // pred_check_branch
        %173 = sbr.rel (%p171) target = $region28
      $region27: #{f.3} parent=11 // pred_region
        _
      $region28: #{f.3} parent=11 // pred_fallthru
        _
    $region12: #{f.3} parent=5 // pred_fallthru
      _
    %p174 = scmp.lt.s32.totalorder %s11, 2
    // Predicated region
    $region29: #{f.3} parent=5 // pred_check
      %p175 = pneg %p174
    $region30: #{f.3} parent=5 // pred_check_branch
      %177 = sbr.rel (%p175) target = $region32
    $region31: #{f.3} parent=5 // pred_region
      // Predicated region
      $region33: #{f.3} parent=31 // pred_check
        %p178 = pneg %p31
      $region34: #{f.3} parent=31 // pred_check_branch
        %180 = sbr.rel (%p178) target = $region36
      $region35: #{f.3} parent=31 // pred_region
        %p181 = scmp.lt.s32.totalorder %s11, 1
        %s182 = scalar_select %p181, %s11, 1
        %s183 = smul.addr %s182, 80
        %s184 = smul.addr %s183, 4
        %s185 = scalar_lea.vmem %s0, %s184
      $region36: #{f.3} parent=31 // pred_fallthru
        _
    $region32: #{f.3} parent=5 // pred_fallthru
      _
    %p186 = scmp.le.s32.totalorder 1, %s11
    %p187 = scmp.lt.s32.totalorder %s11, 3
    %p188 = pnand %p186, %p187
    %p189 = pneg %p188
    // Predicated region
    $region37: #{f.3} parent=5 // pred_check
      _
    $region38: #{f.3} parent=5 // pred_check_branch
      %191 = sbr.rel (%p188) target = $region40
    $region39: #{f.3} parent=5 // pred_region
      %s192 = ssub.s32 %s11, 1
      %p193 = scmp.lt.s32.totalorder %s16, 1
      %s194 = scalar_select %p193, %s16, 1
      %s195 = smul.addr %s194, 80
      %s196 = smul.addr %s195, 4
      %s197 = scalar_lea.vmem %s0, %s196
      %p198 = pneg %p37
      %p199 = pneg %p34
      %p200 = pneg %p58
      %p201 = pneg %p55
      %p202 = pneg %p79
      %p203 = pneg %p76
      %p204 = pneg %p100
      %p205 = pneg %p97
      %p206 = pneg %p121
      %p207 = pneg %p118
      %p208 = pneg %p147
      %p209 = pneg %p144
      %p210 = scmp.lt.s32.totalorder %s16, 1
      %s211 = scalar_select %p210, %s16, 1
      %s212 = smul.addr %s211, 2
      %s213 = smul.addr %s212, 8
      %s214 = scalar_lea.vmem %s5, %s213
      %p215 = scmp.lt.s32.totalorder %s16, 1
      %s216 = scalar_select %p215, %s16, 1
      %s217 = smul.addr %s216, 80
      %s218 = smul.addr %s217, 4
      %s219 = scalar_lea.vmem %s0, %s218
      %p220 = scmp.lt.s32.totalorder %s16, 1
      %s221 = scalar_select %p220, %s16, 1
      %s222 = smul.addr %s221, 2
      %s223 = smul.addr %s222, 8
      %s224 = scalar_lea.vmem %s5, %s223
      %v226 = vld [vmem:[%s1] sm:$0x7]
      %v227 = vld [vmem:[%s2] sm:$0x3f]
      %v228 = vld [vmem:[%s3] sm:$0x3f]
      %v229 = vld [vmem:[%s4] sm:$0x3f]
      %vm230 = vcmask 5120
      %v231 = vsel %vm230, %v227, 0.0
      %232 = vadd.xlane.f32.xlu0 %v231
      %v233 = vpop.xlane.xlu0 %232
      %v234 = vrot.slane %v233, 4
      %v235 = vadd.f32 %v233, %v234
      %v236 = vrot.slane %v235, 2
      %v237 = vadd.f32 %v235, %v236
      %v238 = vrot.slane %v237, 1
      %v239 = vadd.f32 %v237, %v238
      %s240 = vtos %v239
      %v241 = vmul.f32 %v227, %v227
      %v242 = vsel %vm230, %v241, 0.0
      %243 = vadd.xlane.f32.xlu0 %v242
      %v244 = vpop.xlane.xlu0 %243
      %v245 = vrot.slane %v244, 4
      %v246 = vadd.f32 %v244, %v245
      %v247 = vrot.slane %v246, 2
      %v248 = vadd.f32 %v246, %v247
      %v249 = vrot.slane %v248, 1
      %v250 = vadd.f32 %v248, %v249
      %s251 = vtos %v250
      %v252 = vld [vmem:[%s219] sm:$0xff]
      %v253 = vld [vmem:[%s219 + $0x8] sm:$0xff]
      %v254 = vld [vmem:[%s219 + $0x10] sm:$0xff]
      %v255 = vld [vmem:[%s219 + $0x18] sm:$0xff]
      %v256 = vld [vmem:[%s219 + $0x20] sm:$0xff]
      %v257 = vld [vmem:[%s219 + $0x28] sm:$0xff]
      %v258 = vld [vmem:[%s219 + $0x30] sm:$0xff]
      %v259 = vld [vmem:[%s219 + $0x38] sm:$0xff]
      %v260 = vld [vmem:[%s219 + $0x40] sm:$0xff]
      %v261 = vld [vmem:[%s219 + $0x48] sm:$0xff]
      %v262 = vld [vmem:[%s219 + $0x50] sm:$0xff]
      %v263 = vld [vmem:[%s219 + $0x58] sm:$0xff]
      %v264 = vld [vmem:[%s219 + $0x60] sm:$0xff]
      %v265 = vld [vmem:[%s219 + $0x68] sm:$0xff]
      %v266 = vld [vmem:[%s219 + $0x70] sm:$0xff]
      %v267 = vld [vmem:[%s219 + $0x78] sm:$0xff]
      %v268 = vld [vmem:[%s219 + $0x80] sm:$0xff]
      %v269 = vld [vmem:[%s219 + $0x88] sm:$0xff]
      %v270 = vld [vmem:[%s219 + $0x90] sm:$0xff]
      %v271 = vld [vmem:[%s219 + $0x98] sm:$0xff]
      %v272 = vld [vmem:[%s219 + $0xa0] sm:$0xff]
      %v273 = vld [vmem:[%s219 + $0xa8] sm:$0xff]
      %v274 = vld [vmem:[%s219 + $0xb0] sm:$0xff]
      %v275 = vld [vmem:[%s219 + $0xb8] sm:$0xff]
      %v276 = vld [vmem:[%s219 + $0xc0] sm:$0xff]
      %v277 = vld [vmem:[%s219 + $0xc8] sm:$0xff]
      %v278 = vld [vmem:[%s219 + $0xd0] sm:$0xff]
      %v279 = vld [vmem:[%s219 + $0xd8] sm:$0xff]
      %v280 = vld [vmem:[%s219 + $0xe0] sm:$0xff]
      %v281 = vld [vmem:[%s219 + $0xe8] sm:$0xff]
      %v282 = vld [vmem:[%s219 + $0xf0] sm:$0xff]
      %v283 = vld [vmem:[%s219 + $0xf8] sm:$0xff]
      %v284 = vld [vmem:[%s219 + $0x100] sm:$0xff]
      %v285 = vld [vmem:[%s219 + $0x108] sm:$0xff]
      %v286 = vld [vmem:[%s219 + $0x110] sm:$0xff]
      %v287 = vld [vmem:[%s219 + $0x118] sm:$0xff]
      %v288 = vld [vmem:[%s219 + $0x120] sm:$0x33]
      %v289 = vld [vmem:[%s219 + $0x128] sm:$0x33]
      %v290 = vld [vmem:[%s219 + $0x130] sm:$0x33]
      %v291 = vld [vmem:[%s219 + $0x138] sm:$0x33]
      %v332 = vunpack.c.l.b16 %v252
      %v333 = vunpack.c.h.b16 %v252
      %v334 = vunpack.c.l.b16 %v253
      %v335 = vunpack.c.h.b16 %v253
      %v336 = vunpack.c.l.b16 %v254
      %v337 = vunpack.c.h.b16 %v254
      %v338 = vunpack.c.l.b16 %v255
      %v339 = vunpack.c.h.b16 %v255
      %v340 = vunpack.c.l.b16 %v256
      %v341 = vunpack.c.h.b16 %v256
      %v342 = vunpack.c.l.b16 %v257
      %v343 = vunpack.c.h.b16 %v257
      %v344 = vunpack.c.l.b16 %v258
      %v345 = vunpack.c.h.b16 %v258
      %v346 = vunpack.c.l.b16 %v259
      %v347 = vunpack.c.h.b16 %v259
      %v348 = vunpack.c.l.b16 %v260
      %v349 = vunpack.c.h.b16 %v260
      %v350 = vunpack.c.l.b16 %v261
      %v351 = vunpack.c.h.b16 %v261
      %v352 = vunpack.c.l.b16 %v262
      %v353 = vunpack.c.h.b16 %v262
      %v354 = vunpack.c.l.b16 %v263
      %v355 = vunpack.c.h.b16 %v263
      %v356 = vunpack.c.l.b16 %v264
      %v357 = vunpack.c.h.b16 %v264
      %v358 = vunpack.c.l.b16 %v265
      %v359 = vunpack.c.h.b16 %v265
      %v360 = vunpack.c.l.b16 %v266
      %v361 = vunpack.c.h.b16 %v266
      %v362 = vunpack.c.l.b16 %v267
      %v363 = vunpack.c.h.b16 %v267
      %v364 = vunpack.c.l.b16 %v268
      %v365 = vunpack.c.h.b16 %v268
      %v366 = vunpack.c.l.b16 %v269
      %v367 = vunpack.c.h.b16 %v269
      %v368 = vunpack.c.l.b16 %v270
      %v369 = vunpack.c.h.b16 %v270
      %v370 = vunpack.c.l.b16 %v271
      %v371 = vunpack.c.h.b16 %v271
      %v372 = vunpack.c.l.b16 %v272
      %v373 = vunpack.c.h.b16 %v272
      %v374 = vunpack.c.l.b16 %v273
      %v375 = vunpack.c.h.b16 %v273
      %v376 = vunpack.c.l.b16 %v274
      %v377 = vunpack.c.h.b16 %v274
      %v378 = vunpack.c.l.b16 %v275
      %v379 = vunpack.c.h.b16 %v275
      %v380 = vunpack.c.l.b16 %v276
      %v381 = vunpack.c.h.b16 %v276
      %v382 = vunpack.c.l.b16 %v277
      %v383 = vunpack.c.h.b16 %v277
      %v384 = vunpack.c.l.b16 %v278
      %v385 = vunpack.c.h.b16 %v278
      %v386 = vunpack.c.l.b16 %v279
      %v387 = vunpack.c.h.b16 %v279
      %v388 = vunpack.c.l.b16 %v280
      %v389 = vunpack.c.h.b16 %v280
      %v390 = vunpack.c.l.b16 %v281
      %v391 = vunpack.c.h.b16 %v281
      %v392 = vunpack.c.l.b16 %v282
      %v393 = vunpack.c.h.b16 %v282
      %v394 = vunpack.c.l.b16 %v283
      %v395 = vunpack.c.h.b16 %v283
      %v396 = vunpack.c.l.b16 %v284
      %v397 = vunpack.c.h.b16 %v284
      %v398 = vunpack.c.l.b16 %v285
      %v399 = vunpack.c.h.b16 %v285
      %v400 = vunpack.c.l.b16 %v286
      %v401 = vunpack.c.h.b16 %v286
      %v402 = vunpack.c.l.b16 %v287
      %v403 = vunpack.c.h.b16 %v287
      %v404 = vunpack.c.l.b16 %v288
      %v405 = vunpack.c.h.b16 %v288
      %v406 = vunpack.c.l.b16 %v289
      %v407 = vunpack.c.h.b16 %v289
      %v408 = vunpack.c.l.b16 %v290
      %v409 = vunpack.c.h.b16 %v290
      %v410 = vunpack.c.l.b16 %v291
      %v411 = vunpack.c.h.b16 %v291
      %v412 = vpack.c.b16 %v340, %v332
      %v413 = vpack.c.b16 %v341, %v333
      %v414 = vpack.c.b16 %v342, %v334
      %v415 = vpack.c.b16 %v343, %v335
      %v416 = vpack.c.b16 %v344, %v336
      %v417 = vpack.c.b16 %v345, %v337
      %v418 = vpack.c.b16 %v346, %v338
      %v419 = vpack.c.b16 %v347, %v339
      %v420 = vpack.c.b16 %v356, %v348
      %v421 = vpack.c.b16 %v357, %v349
      %v422 = vpack.c.b16 %v358, %v350
      %v423 = vpack.c.b16 %v359, %v351
      %v424 = vpack.c.b16 %v360, %v352
      %v425 = vpack.c.b16 %v361, %v353
      %v426 = vpack.c.b16 %v362, %v354
      %v427 = vpack.c.b16 %v363, %v355
      %v428 = vpack.c.b16 %v372, %v364
      %v429 = vpack.c.b16 %v373, %v365
      %v430 = vpack.c.b16 %v374, %v366
      %v431 = vpack.c.b16 %v375, %v367
      %v432 = vpack.c.b16 %v376, %v368
      %v433 = vpack.c.b16 %v377, %v369
      %v434 = vpack.c.b16 %v378, %v370
      %v435 = vpack.c.b16 %v379, %v371
      %v436 = vpack.c.b16 %v388, %v380
      %v437 = vpack.c.b16 %v389, %v381
      %v438 = vpack.c.b16 %v390, %v382
      %v439 = vpack.c.b16 %v391, %v383
      %v440 = vpack.c.b16 %v392, %v384
      %v441 = vpack.c.b16 %v393, %v385
      %v442 = vpack.c.b16 %v394, %v386
      %v443 = vpack.c.b16 %v395, %v387
      %v444 = vpack.c.b16 %v404, %v396
      %v445 = vpack.c.b16 %v405, %v397
      %v446 = vpack.c.b16 %v406, %v398
      %v447 = vpack.c.b16 %v407, %v399
      %v448 = vpack.c.b16 %v408, %v400
      %v449 = vpack.c.b16 %v409, %v401
      %v450 = vpack.c.b16 %v410, %v402
      %v451 = vpack.c.b16 %v411, %v403
      %vm484 = vcmask 613376
      %v486 = vsel %vm484, %v226, 0
      %vm488 = vcmask 1044480
      %vm489 = vcmask 1045504
      %v490 = vsel %vm488, 4294967295, 65535
      %v491 = vsel %vm489, %v490, 0
      %v493 = vand.u32 %v444, %v491
      %v496 = vand.u32 %v445, %v491
      %v499 = vand.u32 %v446, %v491
      %v502 = vand.u32 %v447, %v491
      %v505 = vand.u32 %v448, %v491
      %v508 = vand.u32 %v449, %v491
      %v511 = vand.u32 %v450, %v491
      %v514 = vand.u32 %v451, %v491
      %516 = vmatprep.subr.bf16.mxu0 %v413
      %517 = vmatpush1.bf16.msra.mxu0 %v412
      %518 = vmatprep.subr.bf16.mxu0 %v421
      %519 = vmatpush1.bf16.msra.mxu0 %v420
      %520 = vmatprep.subr.bf16.mxu0 %v429
      %521 = vmatpush1.bf16.msra.mxu0 %v428
      %522 = vmatprep.subr.bf16.mxu0 %v437
      %523 = vmatpush1.bf16.msra.mxu0 %v436
      %524 = vmatprep.subr.bf16.mxu0 %v496
      %525 = vmatpush1.bf16.msra.mxu0 %v493
      %526 = vmatprep.subr.bf16.mxu0 0
      %527 = vmatpush1.bf16.msra.mxu0 0
      %528 = vmatprep.subr.bf16.mxu0 0
      %529 = vmatpush1.bf16.msra.mxu0 0
      %530 = vmatprep.subr.bf16.mxu0 0
      %531 = vmatpush1.bf16.msra.mxu0 0
      %532 = vmatprep.subr.bf16.mxu0 0
      %533 = vmatpush1.bf16.msra.mxu0 0
      %534 = vmatprep.subr.bf16.mxu0 0
      %535 = vmatpush1.bf16.msra.mxu0 0
      %536 = vmatprep.subr.bf16.mxu0 0
      %537 = vmatpush1.bf16.msra.mxu0 0
      %538 = vmatprep.subr.bf16.mxu0 0
      %539 = vmatpush1.bf16.msra.mxu0 0
      %540 = vmatprep.subr.bf16.mxu0 0
      %541 = vmatpush1.bf16.msra.mxu0 0
      %542 = vmatprep.subr.bf16.mxu0 0
      %543 = vmatpush1.bf16.msra.mxu0 0
      %544 = vmatprep.subr.bf16.mxu0 0
      %545 = vmatpush1.bf16.msra.mxu0 0
      %546 = vmatprep.subr.bf16.mxu0 0
      %547 = vmatpush1.bf16.msra.mxu0 0
      %548 = vmatprep.mubr.bf16.mxu0 0
      %549 = vmatmul.mubr.bf16.gmra.mrb[0].mxu0 %v486
      %v550 = vpop.f32.mrb[0].mxu0
      %v551 = vadd.f32 0.0, %v550
      %v552 = vpop.f32.mrb[0].mxu0
      %v553 = vadd.f32 0.0, %v552
      %v554 = vpop.f32.mrb[0].mxu0
      %v555 = vpop.f32.mrb[0].mxu0
      %556 = vdwg.mxu0
      %557 = vmatprep.subr.bf16.mxu0 %v415
      %558 = vmatpush1.bf16.msra.mxu0 %v414
      %559 = vmatprep.subr.bf16.mxu0 %v423
      %560 = vmatpush1.bf16.msra.mxu0 %v422
      %561 = vmatprep.subr.bf16.mxu0 %v431
      %562 = vmatpush1.bf16.msra.mxu0 %v430
      %563 = vmatprep.subr.bf16.mxu0 %v439
      %564 = vmatpush1.bf16.msra.mxu0 %v438
      %565 = vmatprep.subr.bf16.mxu0 %v502
      %566 = vmatpush1.bf16.msra.mxu0 %v499
      %567 = vmatprep.subr.bf16.mxu0 0
      %568 = vmatpush1.bf16.msra.mxu0 0
      %569 = vmatprep.subr.bf16.mxu0 0
      %570 = vmatpush1.bf16.msra.mxu0 0
      %571 = vmatprep.subr.bf16.mxu0 0
      %572 = vmatpush1.bf16.msra.mxu0 0
      %573 = vmatprep.subr.bf16.mxu0 0
      %574 = vmatpush1.bf16.msra.mxu0 0
      %575 = vmatprep.subr.bf16.mxu0 0
      %576 = vmatpush1.bf16.msra.mxu0 0
      %577 = vmatprep.subr.bf16.mxu0 0
      %578 = vmatpush1.bf16.msra.mxu0 0
      %579 = vmatprep.subr.bf16.mxu0 0
      %580 = vmatpush1.bf16.msra.mxu0 0
      %581 = vmatprep.subr.bf16.mxu0 0
      %582 = vmatpush1.bf16.msra.mxu0 0
      %583 = vmatprep.subr.bf16.mxu0 0
      %584 = vmatpush1.bf16.msra.mxu0 0
      %585 = vmatprep.subr.bf16.mxu0 0
      %586 = vmatpush1.bf16.msra.mxu0 0
      %587 = vmatprep.subr.bf16.mxu0 0
      %588 = vmatpush1.bf16.msra.mxu0 0
      %589 = vmatprep.mubr.bf16.mxu0 0
      %590 = vmatmul.mubr.bf16.gmra.mrb[0].mxu0 %v486
      %v591 = vpop.f32.mrb[0].mxu0
      %v592 = vadd.f32 0.0, %v591
      %v593 = vpop.f32.mrb[0].mxu0
      %v594 = vadd.f32 0.0, %v593
      %v595 = vpop.f32.mrb[0].mxu0
      %v596 = vpop.f32.mrb[0].mxu0
      %597 = vdwg.mxu0
      %598 = vmatprep.subr.bf16.mxu0 %v417
      %599 = vmatpush1.bf16.msra.mxu0 %v416
      %600 = vmatprep.subr.bf16.mxu0 %v425
      %601 = vmatpush1.bf16.msra.mxu0 %v424
      %602 = vmatprep.subr.bf16.mxu0 %v433
      %603 = vmatpush1.bf16.msra.mxu0 %v432
      %604 = vmatprep.subr.bf16.mxu0 %v441
      %605 = vmatpush1.bf16.msra.mxu0 %v440
      %606 = vmatprep.subr.bf16.mxu0 %v508
      %607 = vmatpush1.bf16.msra.mxu0 %v505
      %608 = vmatprep.subr.bf16.mxu0 0
      %609 = vmatpush1.bf16.msra.mxu0 0
      %610 = vmatprep.subr.bf16.mxu0 0
      %611 = vmatpush1.bf16.msra.mxu0 0
      %612 = vmatprep.subr.bf16.mxu0 0
      %613 = vmatpush1.bf16.msra.mxu0 0
      %614 = vmatprep.subr.bf16.mxu0 0
      %615 = vmatpush1.bf16.msra.mxu0 0
      %616 = vmatprep.subr.bf16.mxu0 0
      %617 = vmatpush1.bf16.msra.mxu0 0
      %618 = vmatprep.subr.bf16.mxu0 0
      %619 = vmatpush1.bf16.msra.mxu0 0
      %620 = vmatprep.subr.bf16.mxu0 0
      %621 = vmatpush1.bf16.msra.mxu0 0
      %622 = vmatprep.subr.bf16.mxu0 0
      %623 = vmatpush1.bf16.msra.mxu0 0
      %624 = vmatprep.subr.bf16.mxu0 0
      %625 = vmatpush1.bf16.msra.mxu0 0
      %626 = vmatprep.subr.bf16.mxu0 0
      %627 = vmatpush1.bf16.msra.mxu0 0
      %628 = vmatprep.subr.bf16.mxu0 0
      %629 = vmatpush1.bf16.msra.mxu0 0
      %630 = vmatprep.mubr.bf16.mxu0 0
      %631 = vmatmul.mubr.bf16.gmra.mrb[0].mxu0 %v486
      %v632 = vpop.f32.mrb[0].mxu0
      %v633 = vadd.f32 0.0, %v632
      %v634 = vpop.f32.mrb[0].mxu0
      %v635 = vadd.f32 0.0, %v634
      %v636 = vpop.f32.mrb[0].mxu0
      %v637 = vpop.f32.mrb[0].mxu0
      %638 = vdwg.mxu0
      %639 = vmatprep.subr.bf16.mxu0 %v419
      %640 = vmatpush1.bf16.msra.mxu0 %v418
      %641 = vmatprep.subr.bf16.mxu0 %v427
      %642 = vmatpush1.bf16.msra.mxu0 %v426
      %643 = vmatprep.subr.bf16.mxu0 %v435
      %644 = vmatpush1.bf16.msra.mxu0 %v434
      %645 = vmatprep.subr.bf16.mxu0 %v443
      %646 = vmatpush1.bf16.msra.mxu0 %v442
      %647 = vmatprep.subr.bf16.mxu0 %v514
      %648 = vmatpush1.bf16.msra.mxu0 %v511
      %649 = vmatprep.subr.bf16.mxu0 0
      %650 = vmatpush1.bf16.msra.mxu0 0
      %651 = vmatprep.subr.bf16.mxu0 0
      %652 = vmatpush1.bf16.msra.mxu0 0
      %653 = vmatprep.subr.bf16.mxu0 0
      %654 = vmatpush1.bf16.msra.mxu0 0
      %655 = vmatprep.subr.bf16.mxu0 0
      %656 = vmatpush1.bf16.msra.mxu0 0
      %657 = vmatprep.subr.bf16.mxu0 0
      %658 = vmatpush1.bf16.msra.mxu0 0
      %659 = vmatprep.subr.bf16.mxu0 0
      %660 = vmatpush1.bf16.msra.mxu0 0
      %661 = vmatprep.subr.bf16.mxu0 0
      %662 = vmatpush1.bf16.msra.mxu0 0
      %663 = vmatprep.subr.bf16.mxu0 0
      %664 = vmatpush1.bf16.msra.mxu0 0
      %665 = vmatprep.subr.bf16.mxu0 0
      %666 = vmatpush1.bf16.msra.mxu0 0
      %667 = vmatprep.subr.bf16.mxu0 0
      %668 = vmatpush1.bf16.msra.mxu0 0
      %669 = vmatprep.subr.bf16.mxu0 0
      %670 = vmatpush1.bf16.msra.mxu0 0
      %671 = vmatprep.mubr.bf16.mxu0 0
      %672 = vmatmul.mubr.bf16.gmra.mrb[0].mxu0 %v486
      %v673 = vpop.f32.mrb[0].mxu0
      %v674 = vadd.f32 0.0, %v673
      %v675 = vpop.f32.mrb[0].mxu0
      %v676 = vadd.f32 0.0, %v675
      %v677 = vpop.f32.mrb[0].mxu0
      %v678 = vpop.f32.mrb[0].mxu0
      %679 = vdwg.mxu0
      %v680 = vsel %vm489, %v551, 0.0
      %v681 = vsel %vm489, %v553, 0.0
      %v682 = vadd.f32 %v680, %v681
      %v683 = vsel %vm489, %v592, 0.0
      %v684 = vadd.f32 %v682, %v683
      %v685 = vsel %vm489, %v594, 0.0
      %v686 = vadd.f32 %v684, %v685
      %v687 = vsel %vm489, %v633, 0.0
      %v688 = vadd.f32 %v686, %v687
      %v689 = vsel %vm489, %v635, 0.0
      %v690 = vadd.f32 %v688, %v689
      %v691 = vsel %vm489, %v674, 0.0
      %v692 = vadd.f32 %v690, %v691
      %v693 = vsel %vm489, %v676, 0.0
      %v694 = vadd.f32 %v692, %v693
      %695 = vadd.xlane.f32.xlu0 %v694
      %v696 = vpop.xlane.xlu0 %695
      %v697 = vsel %vm230, %v696, 0.0
      %698 = vadd.xlane.f32.xlu0 %v697
      %v699 = vpop.xlane.xlu0 %698
      %v700 = vrot.slane %v699, 4
      %v701 = vadd.f32 %v699, %v700
      %v702 = vrot.slane %v701, 2
      %v703 = vadd.f32 %v701, %v702
      %v704 = vrot.slane %v703, 1
      %v705 = vadd.f32 %v703, %v704
      %s706 = vtos %v705
      %s707 = smul.f32 %s240, 784.0
      %s708 = sadd.f32 %s706, %s707
      %v709 = vmul.f32 %v551, %v551
      %v710 = vmul.f32 %v553, %v553
      %v711 = vmul.f32 %v592, %v592
      %v712 = vmul.f32 %v594, %v594
      %v713 = vmul.f32 %v633, %v633
      %v714 = vmul.f32 %v635, %v635
      %v715 = vmul.f32 %v674, %v674
      %v716 = vmul.f32 %v676, %v676
      %v717 = vsel %vm489, %v709, 0.0
      %v718 = vsel %vm489, %v710, 0.0
      %v719 = vadd.f32 %v717, %v718
      %v720 = vsel %vm489, %v711, 0.0
      %v721 = vadd.f32 %v719, %v720
      %v722 = vsel %vm489, %v712, 0.0
      %v723 = vadd.f32 %v721, %v722
      %v724 = vsel %vm489, %v713, 0.0
      %v725 = vadd.f32 %v723, %v724
      %v726 = vsel %vm489, %v714, 0.0
      %v727 = vadd.f32 %v725, %v726
      %v728 = vsel %vm489, %v715, 0.0
      %v729 = vadd.f32 %v727, %v728
      %v730 = vsel %vm489, %v716, 0.0
      %v731 = vadd.f32 %v729, %v730
      %732 = vadd.xlane.f32.xlu0 %v731
      %v733 = vpop.xlane.xlu0 %732
      %v734 = vrot.slane %v733, 4
      %v735 = vadd.f32 %v733, %v734
      %v736 = vrot.slane %v735, 2
      %v737 = vadd.f32 %v735, %v736
      %v738 = vrot.slane %v737, 1
      %v739 = vadd.f32 %v737, %v738
      %s740 = vtos %v739
      %v741 = vmul.f32 %v227, %v696
      %v742 = vsel %vm230, %v741, 0.0
      %743 = vadd.xlane.f32.xlu0 %v742
      %v744 = vpop.xlane.xlu0 %743
      %v745 = vrot.slane %v744, 4
      %v746 = vadd.f32 %v744, %v745
      %v747 = vrot.slane %v746, 2
      %v748 = vadd.f32 %v746, %v747
      %v749 = vrot.slane %v748, 1
      %v750 = vadd.f32 %v748, %v749
      %s751 = vtos %v750
      %s752 = smul.f32 %s751, 2.0
      %s753 = sadd.f32 %s740, %s752
      %s754 = smul.f32 %s251, 784.0
      %s755 = sadd.f32 %s753, %s754
      %s756 = smul.f32 %s708, 0.00021258503
      %s757 = smul.f32 %s755, 0.00021258503
      %s758 = smul.f32 %s756, %s756
      %s759 = ssub.f32 %s757, %s758
      %s760 = sadd.f32 %s759, 1e-05
      %v761 = vstv %s760
      %v762 = vrsqrt.pop %v761
      %s763 = vtos %v762
      %v764 = vstv %s763
      %v765 = vmul.f32 %v764, %v228
      %v766 = vstv %s756
      %v767 = vsub.f32 %v227, %v766
      %v768 = vmul.f32 %v767, %v764
      %v769 = vmul.f32 %v768, %v228
      %v770 = vadd.f32 %v769, %v229
      %772 = vset.pattern.permute.xlu0 0
      %773 = vperm.xlu0 %772, %v765
      %v774 = vpop.permute.xlu0 %773
      %v776 = vmul.f32 %v551, %v774
      %v777 = vmul.f32 %v553, %v774
      %v778 = vmul.f32 %v592, %v774
      %v779 = vmul.f32 %v594, %v774
      %v780 = vmul.f32 %v633, %v774
      %v781 = vmul.f32 %v635, %v774
      %v782 = vmul.f32 %v674, %v774
      %v783 = vmul.f32 %v676, %v774
      %785 = vset.pattern.permute.xlu0 0
      %786 = vperm.xlu0 %785, %v770
      %v787 = vpop.permute.xlu0 %786
      %v789 = vadd.f32 %v776, %v787
      %v790 = vadd.f32 %v777, %v787
      %v791 = vadd.f32 %v778, %v787
      %v792 = vadd.f32 %v779, %v787
      %v793 = vadd.f32 %v780, %v787
      %v794 = vadd.f32 %v781, %v787
      %v795 = vadd.f32 %v782, %v787
      %v796 = vadd.f32 %v783, %v787
      %v797 = vmax.f32 %v789, 0.0
      %v798 = vmax.f32 %v790, 0.0
      %v799 = vmax.f32 %v791, 0.0
      %v800 = vmax.f32 %v792, 0.0
      %v801 = vmax.f32 %v793, 0.0
      %v802 = vmax.f32 %v794, 0.0
      %v803 = vmax.f32 %v795, 0.0
      %v804 = vmax.f32 %v796, 0.0
      %v805 = vmax.f32 %v797, %v799
      %v806 = vmax.f32 %v798, %v800
      %v807 = vmax.f32 %v801, %v803
      %v808 = vmax.f32 %v802, %v804
      %v809 = vmax.f32 %v805, %v807
      %v810 = vmax.f32 %v806, %v808
      %811 = vst [vmem:[%s224] sm:$0x3f] %v809
      %812 = vst [vmem:[%s224 + $0x8] sm:$0x3f] %v810
      %p813 = scmp.lt.s32.totalorder %s16, 1
      %s814 = scalar_select %p813, %s16, 1
      %s815 = smul.addr %s814, 2
      %s816 = smul.addr %s815, 8
      %s817 = scalar_lea.vmem %s5, %s816
      // Predicated region
      $region41: #{f.3} parent=39 // pred_check
        %p818 = pneg %p144
      $region42: #{f.3} parent=39 // pred_check_branch
        %820 = sbr.rel (%p818) target = $region44
      $region43: #{f.3} parent=39 // pred_region
        _
      $region44: #{f.3} parent=39 // pred_fallthru
        _
    $region40: #{f.3} parent=5 // pred_fallthru
      _
    %p821 = scmp.le.s32.totalorder 2, %s11
    // Predicated region
    $region45: #{f.3} parent=5 // pred_check
      %p822 = pneg %p821
    $region46: #{f.3} parent=5 // pred_check_branch
      %824 = sbr.rel (%p822) target = $region48
    $region47: #{f.3} parent=5 // pred_region
      %s825 = ssub.s32 %s11, 2
      // Predicated region
      $region49: #{f.3} parent=47 // pred_check
        %p826 = pneg %p150
      $region50: #{f.3} parent=47 // pred_check_branch
        %828 = sbr.rel (%p826) target = $region52
      $region51: #{f.3} parent=47 // pred_region
        %p829 = scmp.lt.s32.totalorder %s17, 1
        %s830 = scalar_select %p829, %s17, 1
        %s831 = smul.addr %s830, 2
        %s832 = smul.addr %s831, 8
        %s833 = scalar_lea.vmem %s5, %s832
      $region52: #{f.3} parent=47 // pred_fallthru
        _
    $region48: #{f.3} parent=5 // pred_fallthru
      _
  $region6: #{f.3} parent=0 // loop_footer
    %s15 = sadd.s32 1, %s11
  $region7: #{f.3} parent=0 // loop_footer_branch
    %10 = sbr.rel target = $region3
  $region8: #{f.3} parent=0 // loop_exit
    _

// kernel: f.4
$region0: #{f.4}
  #allocation0 [shape = 'u32[]', space=smem, size = 0x4, offset = 0x4, fixed_abs, tag = 'smem constant byte address 0x4 - core index']
  #allocation1 [shape = 'u32[144,128]{1,0:T(1,128)}', space=vmem, size = 0x12000, scoped, tag = 'internal scratch']
  %s0 = inlined_call_operand.vmem [shape: bf16[2,150,512], index: 0, kind: input, shape index: {}]
  %s1 = inlined_call_operand.vmem [shape: bf16[16,150], index: 1, kind: input, shape index: {}]
  %s2 = inlined_call_operand.vmem [shape: f32[16,1], index: 2, kind: input, shape index: {}]
  %s3 = inlined_call_operand.vmem [shape: f32[16,1], index: 3, kind: input, shape index: {}]
  %s4 = inlined_call_operand.vmem [shape: f32[16,1], index: 4, kind: input, shape index: {}]
  %s5 = inlined_call_operand.vmem [shape: f32[2,16,128], index: 5, kind: output, shape index: {}]
  %s6 = sld [smem:[#allocation0]]
  $region53: #{f.4} parent=0
    _
  %s8 = ssub.s32 1, %s6
  %s9 = scalar_select 0, %s8, %s6
  loop: start=0, step=1, limit=4
  $region2: #{f.4} parent=0 // loop_pre_header
    _
  $region3: #{f.4} parent=0 // loop_header
    %s11 = sphi 0, %s15
    %p12 = scmp.ge.s32.totalorder %s11, 4
    %s21 = sphi 0, %s23
    %s24 = sphi 0, %s21
    %s25 = sphi 0, %s24
    %s41 = sphi 0, %s25
    %s45 = sphi 0, %s45
    %s47 = sphi 0, %s45
    %s48 = sphi 0, %s47
    %s62 = sphi 0, %s48
    %s66 = sphi 0, %s66
    %s68 = sphi 0, %s66
    %s69 = sphi 0, %s68
    %s83 = sphi 0, %s69
    %s87 = sphi 0, %s87
    %s89 = sphi 0, %s87
    %s90 = sphi 0, %s89
    %s104 = sphi 0, %s90
    %s108 = sphi 0, %s108
    %s110 = sphi 0, %s108
    %s111 = sphi 0, %s110
    %s125 = sphi 0, %s111
    %s131 = sphi 0, %s133
    %s134 = sphi 0, %s131
    %s135 = sphi 0, %s134
    %s151 = sphi 0, %s135
  $region4: #{f.4} parent=0 // loop_header_branch
    %14 = sbr.rel (%p12) target = $region8
  $region5: #{f.4} parent=0 // loop_body
    %s16 = ssub.s32 %s11, 1
    %s17 = ssub.s32 %s11, 2
    %s18 = sadd.s32 %s11, 1
    %s19 = ssub.s32 %s11, %s18
    %p20 = scmp.eq.s32.totalorder %s19, 0
    %s22 = sadd.s32 %s21, 1
    %s23 = scalar_select %p20, %s21, %s22
    %p26 = pneg %p20
    %p27 = scmp.eq.s32.totalorder %s11, 1
    %p28 = por %p26, %p27
    %p29 = scmp.ne.s32.totalorder %s21, %s24
    %p30 = scmp.eq.s32.totalorder %s11, 0
    %p31 = por %p29, %p30
    %p32 = scmp.ne.s32.totalorder %s21, %s24
    %p33 = scmp.eq.s32.totalorder %s16, 1
    %p34 = por %p32, %p33
    %p35 = scmp.ne.s32.totalorder %s24, %s25
    %p36 = scmp.eq.s32.totalorder %s16, 0
    %p37 = por %p35, %p36
    %p38 = scmp.ne.s32.totalorder %s24, %s25
    %p39 = scmp.eq.s32.totalorder %s17, 1
    %p40 = por %p38, %p39
    %p42 = scmp.ne.s32.totalorder %s25, %s41
    %p43 = scmp.eq.s32.totalorder %s17, 0
    %p44 = por %p42, %p43
    %s46 = sadd.s32 %s45, 1
    %p49 = scmp.eq.s32.totalorder %s11, 1
    %p50 = scmp.ne.s32.totalorder %s45, %s47
    %p51 = scmp.eq.s32.totalorder %s11, 0
    %p52 = por %p50, %p51
    %p53 = scmp.ne.s32.totalorder %s45, %s47
    %p54 = scmp.eq.s32.totalorder %s16, 1
    %p55 = por %p53, %p54
    %p56 = scmp.ne.s32.totalorder %s47, %s48
    %p57 = scmp.eq.s32.totalorder %s16, 0
    %p58 = por %p56, %p57
    %p59 = scmp.ne.s32.totalorder %s47, %s48
    %p60 = scmp.eq.s32.totalorder %s17, 1
    %p61 = por %p59, %p60
    %p63 = scmp.ne.s32.totalorder %s48, %s62
    %p64 = scmp.eq.s32.totalorder %s17, 0
    %p65 = por %p63, %p64
    %s67 = sadd.s32 %s66, 1
    %p70 = scmp.eq.s32.totalorder %s11, 1
    %p71 = scmp.ne.s32.totalorder %s66, %s68
    %p72 = scmp.eq.s32.totalorder %s11, 0
    %p73 = por %p71, %p72
    %p74 = scmp.ne.s32.totalorder %s66, %s68
    %p75 = scmp.eq.s32.totalorder %s16, 1
    %p76 = por %p74, %p75
    %p77 = scmp.ne.s32.totalorder %s68, %s69
    %p78 = scmp.eq.s32.totalorder %s16, 0
    %p79 = por %p77, %p78
    %p80 = scmp.ne.s32.totalorder %s68, %s69
    %p81 = scmp.eq.s32.totalorder %s17, 1
    %p82 = por %p80, %p81
    %p84 = scmp.ne.s32.totalorder %s69, %s83
    %p85 = scmp.eq.s32.totalorder %s17, 0
    %p86 = por %p84, %p85
    %s88 = sadd.s32 %s87, 1
    %p91 = scmp.eq.s32.totalorder %s11, 1
    %p92 = scmp.ne.s32.totalorder %s87, %s89
    %p93 = scmp.eq.s32.totalorder %s11, 0
    %p94 = por %p92, %p93
    %p95 = scmp.ne.s32.totalorder %s87, %s89
    %p96 = scmp.eq.s32.totalorder %s16, 1
    %p97 = por %p95, %p96
    %p98 = scmp.ne.s32.totalorder %s89, %s90
    %p99 = scmp.eq.s32.totalorder %s16, 0
    %p100 = por %p98, %p99
    %p101 = scmp.ne.s32.totalorder %s89, %s90
    %p102 = scmp.eq.s32.totalorder %s17, 1
    %p103 = por %p101, %p102
    %p105 = scmp.ne.s32.totalorder %s90, %s104
    %p106 = scmp.eq.s32.totalorder %s17, 0
    %p107 = por %p105, %p106
    %s109 = sadd.s32 %s108, 1
    %p112 = scmp.eq.s32.totalorder %s11, 1
    %p113 = scmp.ne.s32.totalorder %s108, %s110
    %p114 = scmp.eq.s32.totalorder %s11, 0
    %p115 = por %p113, %p114
    %p116 = scmp.ne.s32.totalorder %s108, %s110
    %p117 = scmp.eq.s32.totalorder %s16, 1
    %p118 = por %p116, %p117
    %p119 = scmp.ne.s32.totalorder %s110, %s111
    %p120 = scmp.eq.s32.totalorder %s16, 0
    %p121 = por %p119, %p120
    %p122 = scmp.ne.s32.totalorder %s110, %s111
    %p123 = scmp.eq.s32.totalorder %s17, 1
    %p124 = por %p122, %p123
    %p126 = scmp.ne.s32.totalorder %s111, %s125
    %p127 = scmp.eq.s32.totalorder %s17, 0
    %p128 = por %p126, %p127
    %s129 = ssub.s32 %s11, %s18
    %p130 = scmp.eq.s32.totalorder %s129, 0
    %s132 = sadd.s32 %s131, 1
    %s133 = scalar_select %p130, %s131, %s132
    %p136 = pneg %p130
    %p137 = scmp.eq.s32.totalorder %s11, 1
    %p138 = por %p136, %p137
    %p139 = scmp.ne.s32.totalorder %s131, %s134
    %p140 = scmp.eq.s32.totalorder %s11, 0
    %p141 = por %p139, %p140
    %p142 = scmp.ne.s32.totalorder %s131, %s134
    %p143 = scmp.eq.s32.totalorder %s16, 1
    %p144 = por %p142, %p143
    %p145 = scmp.ne.s32.totalorder %s134, %s135
    %p146 = scmp.eq.s32.totalorder %s16, 0
    %p147 = por %p145, %p146
    %p148 = scmp.ne.s32.totalorder %s134, %s135
    %p149 = scmp.eq.s32.totalorder %s17, 1
    %p150 = por %p148, %p149
    %p152 = scmp.ne.s32.totalorder %s135, %s151
    %p153 = scmp.eq.s32.totalorder %s17, 0
    %p154 = por %p152, %p153
    %p155 = scmp.le.s32.totalorder 1, %s11
    %p156 = scmp.lt.s32.totalorder %s11, 3
    %p157 = pnand %p155, %p156
    %p158 = pneg %p157
    // Predicated region
    $region9: #{f.4} parent=5 // pred_check
      _
    $region10: #{f.4} parent=5 // pred_check_branch
      %160 = sbr.rel (%p157) target = $region12
    $region11: #{f.4} parent=5 // pred_region
      %s161 = ssub.s32 %s11, 1
      // Predicated region
      $region13: #{f.4} parent=11 // pred_check
        %p162 = pneg %p58
      $region14: #{f.4} parent=11 // pred_check_branch
        %164 = sbr.rel (%p162) target = $region16
      $region15: #{f.4} parent=11 // pred_region
        _
      $region16: #{f.4} parent=11 // pred_fallthru
        _
      // Predicated region
      $region17: #{f.4} parent=11 // pred_check
        %p165 = pneg %p79
      $region18: #{f.4} parent=11 // pred_check_branch
        %167 = sbr.rel (%p165) target = $region20
      $region19: #{f.4} parent=11 // pred_region
        _
      $region20: #{f.4} parent=11 // pred_fallthru
        _
      // Predicated region
      $region21: #{f.4} parent=11 // pred_check
        %p168 = pneg %p100
      $region22: #{f.4} parent=11 // pred_check_branch
        %170 = sbr.rel (%p168) target = $region24
      $region23: #{f.4} parent=11 // pred_region
        _
      $region24: #{f.4} parent=11 // pred_fallthru
        _
      // Predicated region
      $region25: #{f.4} parent=11 // pred_check
        %p171 = pneg %p121
      $region26: #{f.4} parent=11 // pred_check_branch
        %173 = sbr.rel (%p171) target = $region28
      $region27: #{f.4} parent=11 // pred_region
        _
      $region28: #{f.4} parent=11 // pred_fallthru
        _
    $region12: #{f.4} parent=5 // pred_fallthru
      _
    %p174 = scmp.lt.s32.totalorder %s11, 2
    // Predicated region
    $region29: #{f.4} parent=5 // pred_check
      %p175 = pneg %p174
    $region30: #{f.4} parent=5 // pred_check_branch
      %177 = sbr.rel (%p175) target = $region32
    $region31: #{f.4} parent=5 // pred_region
      // Predicated region
      $region33: #{f.4} parent=31 // pred_check
        %p178 = pneg %p31
      $region34: #{f.4} parent=31 // pred_check_branch
        %180 = sbr.rel (%p178) target = $region36
      $region35: #{f.4} parent=31 // pred_region
        %p181 = scmp.lt.s32.totalorder %s11, 1
        %s182 = scalar_select %p181, %s11, 1
        %s183 = smul.addr %s182, 76
        %s184 = smul.addr %s183, 4
        %s185 = scalar_lea.vmem %s0, %s184
      $region36: #{f.4} parent=31 // pred_fallthru
        _
    $region32: #{f.4} parent=5 // pred_fallthru
      _
    %p186 = scmp.le.s32.totalorder 1, %s11
    %p187 = scmp.lt.s32.totalorder %s11, 3
    %p188 = pnand %p186, %p187
    %p189 = pneg %p188
    // Predicated region
    $region37: #{f.4} parent=5 // pred_check
      _
    $region38: #{f.4} parent=5 // pred_check_branch
      %191 = sbr.rel (%p188) target = $region40
    $region39: #{f.4} parent=5 // pred_region
      %s192 = ssub.s32 %s11, 1
      %p193 = scmp.lt.s32.totalorder %s16, 1
      %s194 = scalar_select %p193, %s16, 1
      %s195 = smul.addr %s194, 76
      %s196 = smul.addr %s195, 4
      %s197 = scalar_lea.vmem %s0, %s196
      %p198 = pneg %p37
      %p199 = pneg %p34
      %p200 = pneg %p58
      %p201 = pneg %p55
      %p202 = pneg %p79
      %p203 = pneg %p76
      %p204 = pneg %p100
      %p205 = pneg %p97
      %p206 = pneg %p121
      %p207 = pneg %p118
      %p208 = pneg %p147
      %p209 = pneg %p144
      %p210 = scmp.lt.s32.totalorder %s16, 1
      %s211 = scalar_select %p210, %s16, 1
      %s212 = smul.addr %s211, 2
      %s213 = smul.addr %s212, 8
      %s214 = scalar_lea.vmem %s5, %s213
      %p215 = scmp.lt.s32.totalorder %s16, 1
      %s216 = scalar_select %p215, %s16, 1
      %s217 = smul.addr %s216, 76
      %s218 = smul.addr %s217, 4
      %s219 = scalar_lea.vmem %s0, %s218
      %p220 = scmp.lt.s32.totalorder %s16, 1
      %s221 = scalar_select %p220, %s16, 1
      %s222 = smul.addr %s221, 2
      %s223 = smul.addr %s222, 8
      %s224 = scalar_lea.vmem %s5, %s223
      %v226 = vld [vmem:[%s1] sm:$0xff]
      %v227 = vld [vmem:[%s1 + $0x8] sm:$0xff]
      %v228 = vld [vmem:[%s2] sm:$0xff]
      %v229 = vld [vmem:[%s2 + $0x8] sm:$0xff]
      %v230 = vld [vmem:[%s3] sm:$0xff]
      %v231 = vld [vmem:[%s3 + $0x8] sm:$0xff]
      %v232 = vld [vmem:[%s4] sm:$0xff]
      %v233 = vld [vmem:[%s4 + $0x8] sm:$0xff]
      %vm234 = vcmask 7168
      %v235 = vsel %vm234, %v228, 0.0
      %v236 = vsel %vm234, %v229, 0.0
      %v237 = vadd.f32 %v235, %v236
      %238 = vadd.xlane.f32.xlu0 %v237
      %v239 = vpop.xlane.xlu0 %238
      %v240 = vrot.slane %v239, 4
      %v241 = vadd.f32 %v239, %v240
      %v242 = vrot.slane %v241, 2
      %v243 = vadd.f32 %v241, %v242
      %v244 = vrot.slane %v243, 1
      %v245 = vadd.f32 %v243, %v244
      %s246 = vtos %v245
      %v247 = vmul.f32 %v228, %v228
      %v248 = vmul.f32 %v229, %v229
      %v249 = vsel %vm234, %v247, 0.0
      %v250 = vsel %vm234, %v248, 0.0
      %v251 = vadd.f32 %v249, %v250
      %252 = vadd.xlane.f32.xlu0 %v251
      %v253 = vpop.xlane.xlu0 %252
      %v254 = vrot.slane %v253, 4
      %v255 = vadd.f32 %v253, %v254
      %v256 = vrot.slane %v255, 2
      %v257 = vadd.f32 %v255, %v256
      %v258 = vrot.slane %v257, 1
      %v259 = vadd.f32 %v257, %v258
      %s260 = vtos %v259
      %v261 = vld [vmem:[%s219] sm:$0xff]
      %v262 = vld [vmem:[%s219 + $0x8] sm:$0xff]
      %v263 = vld [vmem:[%s219 + $0x10] sm:$0xff]
      %v264 = vld [vmem:[%s219 + $0x18] sm:$0xff]
      %v265 = vld [vmem:[%s219 + $0x20] sm:$0xff]
      %v266 = vld [vmem:[%s219 + $0x28] sm:$0xff]
      %v267 = vld [vmem:[%s219 + $0x30] sm:$0xff]
      %v268 = vld [vmem:[%s219 + $0x38] sm:$0xff]
      %v269 = vld [vmem:[%s219 + $0x40] sm:$0xff]
      %v270 = vld [vmem:[%s219 + $0x48] sm:$0xff]
      %v271 = vld [vmem:[%s219 + $0x50] sm:$0xff]
      %v272 = vld [vmem:[%s219 + $0x58] sm:$0xff]
      %v273 = vld [vmem:[%s219 + $0x60] sm:$0xff]
      %v274 = vld [vmem:[%s219 + $0x68] sm:$0xff]
      %v275 = vld [vmem:[%s219 + $0x70] sm:$0xff]
      %v276 = vld [vmem:[%s219 + $0x78] sm:$0xff]
      %v277 = vld [vmem:[%s219 + $0x80] sm:$0xff]
      %v278 = vld [vmem:[%s219 + $0x88] sm:$0xff]
      %v279 = vld [vmem:[%s219 + $0x90] sm:$0xff]
      %v280 = vld [vmem:[%s219 + $0x98] sm:$0xff]
      %v281 = vld [vmem:[%s219 + $0xa0] sm:$0xff]
      %v282 = vld [vmem:[%s219 + $0xa8] sm:$0xff]
      %v283 = vld [vmem:[%s219 + $0xb0] sm:$0xff]
      %v284 = vld [vmem:[%s219 + $0xb8] sm:$0xff]
      %v285 = vld [vmem:[%s219 + $0xc0] sm:$0xff]
      %v286 = vld [vmem:[%s219 + $0xc8] sm:$0xff]
      %v287 = vld [vmem:[%s219 + $0xd0] sm:$0xff]
      %v288 = vld [vmem:[%s219 + $0xd8] sm:$0xff]
      %v289 = vld [vmem:[%s219 + $0xe0] sm:$0xff]
      %v290 = vld [vmem:[%s219 + $0xe8] sm:$0xff]
      %v291 = vld [vmem:[%s219 + $0xf0] sm:$0xff]
      %v292 = vld [vmem:[%s219 + $0xf8] sm:$0xff]
      %v293 = vld [vmem:[%s219 + $0x100] sm:$0xff]
      %v294 = vld [vmem:[%s219 + $0x108] sm:$0xff]
      %v295 = vld [vmem:[%s219 + $0x110] sm:$0xff]
      %v296 = vld [vmem:[%s219 + $0x118] sm:$0xff]
      %v297 = vld [vmem:[%s219 + $0x120] sm:$0x77]
      %v298 = vld [vmem:[%s219 + $0x128] sm:$0x77]
      %v301 = vunpack.c.l.b16 %v226
      %v302 = vunpack.c.h.b16 %v226
      %v303 = vunpack.c.l.b16 %v227
      %v304 = vunpack.c.h.b16 %v227
      %v305 = vpack.c.b16 %v303, %v301
      %v306 = vpack.c.b16 %v304, %v302
      %v346 = vunpack.c.l.b16 %v261
      %v347 = vunpack.c.h.b16 %v261
      %v348 = vunpack.c.l.b16 %v262
      %v349 = vunpack.c.h.b16 %v262
      %v350 = vunpack.c.l.b16 %v263
      %v351 = vunpack.c.h.b16 %v263
      %v352 = vunpack.c.l.b16 %v264
      %v353 = vunpack.c.h.b16 %v264
      %v354 = vunpack.c.l.b16 %v265
      %v355 = vunpack.c.h.b16 %v265
      %v356 = vunpack.c.l.b16 %v266
      %v357 = vunpack.c.h.b16 %v266
      %v358 = vunpack.c.l.b16 %v267
      %v359 = vunpack.c.h.b16 %v267
      %v360 = vunpack.c.l.b16 %v268
      %v361 = vunpack.c.h.b16 %v268
      %v362 = vunpack.c.l.b16 %v269
      %v363 = vunpack.c.h.b16 %v269
      %v364 = vunpack.c.l.b16 %v270
      %v365 = vunpack.c.h.b16 %v270
      %v366 = vunpack.c.l.b16 %v271
      %v367 = vunpack.c.h.b16 %v271
      %v368 = vunpack.c.l.b16 %v272
      %v369 = vunpack.c.h.b16 %v272
      %v370 = vunpack.c.l.b16 %v273
      %v371 = vunpack.c.h.b16 %v273
      %v372 = vunpack.c.l.b16 %v274
      %v373 = vunpack.c.h.b16 %v274
      %v374 = vunpack.c.l.b16 %v275
      %v375 = vunpack.c.h.b16 %v275
      %v376 = vunpack.c.l.b16 %v276
      %v377 = vunpack.c.h.b16 %v276
      %v378 = vunpack.c.l.b16 %v277
      %v379 = vunpack.c.h.b16 %v277
      %v380 = vunpack.c.l.b16 %v278
      %v381 = vunpack.c.h.b16 %v278
      %v382 = vunpack.c.l.b16 %v279
      %v383 = vunpack.c.h.b16 %v279
      %v384 = vunpack.c.l.b16 %v280
      %v385 = vunpack.c.h.b16 %v280
      %v386 = vunpack.c.l.b16 %v281
      %v387 = vunpack.c.h.b16 %v281
      %v388 = vunpack.c.l.b16 %v282
      %v389 = vunpack.c.h.b16 %v282
      %v390 = vunpack.c.l.b16 %v283
      %v391 = vunpack.c.h.b16 %v283
      %v392 = vunpack.c.l.b16 %v284
      %v393 = vunpack.c.h.b16 %v284
      %v394 = vunpack.c.l.b16 %v285
      %v395 = vunpack.c.h.b16 %v285
      %v396 = vunpack.c.l.b16 %v286
      %v397 = vunpack.c.h.b16 %v286
      %v398 = vunpack.c.l.b16 %v287
      %v399 = vunpack.c.h.b16 %v287
      %v400 = vunpack.c.l.b16 %v288
      %v401 = vunpack.c.h.b16 %v288
      %v402 = vunpack.c.l.b16 %v289
      %v403 = vunpack.c.h.b16 %v289
      %v404 = vunpack.c.l.b16 %v290
      %v405 = vunpack.c.h.b16 %v290
      %v406 = vunpack.c.l.b16 %v291
      %v407 = vunpack.c.h.b16 %v291
      %v408 = vunpack.c.l.b16 %v292
      %v409 = vunpack.c.h.b16 %v292
      %v410 = vunpack.c.l.b16 %v293
      %v411 = vunpack.c.h.b16 %v293
      %v412 = vunpack.c.l.b16 %v294
      %v413 = vunpack.c.h.b16 %v294
      %v414 = vunpack.c.l.b16 %v295
      %v415 = vunpack.c.h.b16 %v295
      %v416 = vunpack.c.l.b16 %v296
      %v417 = vunpack.c.h.b16 %v296
      %v418 = vunpack.c.l.b16 %v297
      %v419 = vunpack.c.h.b16 %v297
      %v420 = vunpack.c.l.b16 %v298
      %v421 = vunpack.c.h.b16 %v298
      %v422 = vpack.c.b16 %v350, %v346
      %v423 = vpack.c.b16 %v351, %v347
      %v424 = vpack.c.b16 %v352, %v348
      %v425 = vpack.c.b16 %v353, %v349
      %v426 = vpack.c.b16 %v358, %v354
      %v427 = vpack.c.b16 %v359, %v355
      %v428 = vpack.c.b16 %v360, %v356
      %v429 = vpack.c.b16 %v361, %v357
      %v430 = vpack.c.b16 %v366, %v362
      %v431 = vpack.c.b16 %v367, %v363
      %v432 = vpack.c.b16 %v368, %v364
      %v433 = vpack.c.b16 %v369, %v365
      %v434 = vpack.c.b16 %v374, %v370
      %v435 = vpack.c.b16 %v375, %v371
      %v436 = vpack.c.b16 %v376, %v372
      %v437 = vpack.c.b16 %v377, %v373
      %v438 = vpack.c.b16 %v382, %v378
      %v439 = vpack.c.b16 %v383, %v379
      %v440 = vpack.c.b16 %v384, %v380
      %v441 = vpack.c.b16 %v385, %v381
      %v442 = vpack.c.b16 %v390, %v386
      %v443 = vpack.c.b16 %v391, %v387
      %v444 = vpack.c.b16 %v392, %v388
      %v445 = vpack.c.b16 %v393, %v389
      %v446 = vpack.c.b16 %v398, %v394
      %v447 = vpack.c.b16 %v399, %v395
      %v448 = vpack.c.b16 %v400, %v396
      %v449 = vpack.c.b16 %v401, %v397
      %v450 = vpack.c.b16 %v406, %v402
      %v451 = vpack.c.b16 %v407, %v403
      %v452 = vpack.c.b16 %v408, %v404
      %v453 = vpack.c.b16 %v409, %v405
      %v454 = vpack.c.b16 %v414, %v410
      %v455 = vpack.c.b16 %v415, %v411
      %v456 = vpack.c.b16 %v416, %v412
      %v457 = vpack.c.b16 %v417, %v413
      %v458 = vpack.c.b16 %v418, %v418
      %v459 = vpack.c.b16 %v419, %v419
      %v460 = vpack.c.b16 %v420, %v420
      %v461 = vpack.c.b16 %v421, %v421
      %vm498 = vcmask 179200
      %v500 = vsel %vm498, %v306, 0
      %vm502 = vcmask 1042432
      %v504 = vsel %vm502, %v458, 0
      %v507 = vsel %vm502, %v459, 0
      %v510 = vsel %vm502, %v460, 0
      %v513 = vsel %vm502, %v461, 0
      %515 = vmatprep.subr.bf16.mxu0 %v423
      %516 = vmatpush1.bf16.msra.mxu0 %v422
      %517 = vmatprep.subr.bf16.mxu0 %v427
      %518 = vmatpush1.bf16.msra.mxu0 %v426
      %519 = vmatprep.subr.bf16.mxu0 %v431
      %520 = vmatpush1.bf16.msra.mxu0 %v430
      %521 = vmatprep.subr.bf16.mxu0 %v435
      %522 = vmatpush1.bf16.msra.mxu0 %v434
      %523 = vmatprep.subr.bf16.mxu0 %v439
      %524 = vmatpush1.bf16.msra.mxu0 %v438
      %525 = vmatprep.subr.bf16.mxu0 %v443
      %526 = vmatpush1.bf16.msra.mxu0 %v442
      %527 = vmatprep.subr.bf16.mxu0 %v447
      %528 = vmatpush1.bf16.msra.mxu0 %v446
      %529 = vmatprep.subr.bf16.mxu0 %v451
      %530 = vmatpush1.bf16.msra.mxu0 %v450
      %531 = vmatprep.subr.bf16.mxu0 %v455
      %532 = vmatpush1.bf16.msra.mxu0 %v454
      %533 = vmatprep.subr.bf16.mxu0 %v507
      %534 = vmatpush1.bf16.msra.mxu0 %v504
      %535 = vmatprep.subr.bf16.mxu0 0
      %536 = vmatpush1.bf16.msra.mxu0 0
      %537 = vmatprep.subr.bf16.mxu0 0
      %538 = vmatpush1.bf16.msra.mxu0 0
      %539 = vmatprep.subr.bf16.mxu0 0
      %540 = vmatpush1.bf16.msra.mxu0 0
      %541 = vmatprep.subr.bf16.mxu0 0
      %542 = vmatpush1.bf16.msra.mxu0 0
      %543 = vmatprep.subr.bf16.mxu0 0
      %544 = vmatpush1.bf16.msra.mxu0 0
      %545 = vmatprep.subr.bf16.mxu0 0
      %546 = vmatpush1.bf16.msra.mxu0 0
      %547 = vmatprep.mubr.bf16.mxu0 %v500
      %548 = vmatmul.mubr.bf16.gmra.mrb[0].mxu0 %v305
      %v549 = vpop.f32.mrb[0].mxu0
      %v550 = vadd.f32 0.0, %v549
      %v551 = vpop.f32.mrb[0].mxu0
      %v552 = vadd.f32 0.0, %v551
      %v553 = vpop.f32.mrb[0].mxu0
      %v554 = vadd.f32 0.0, %v553
      %v555 = vpop.f32.mrb[0].mxu0
      %v556 = vadd.f32 0.0, %v555
      %557 = vdwg.mxu0
      %558 = vmatprep.subr.bf16.mxu0 %v425
      %559 = vmatpush1.bf16.msra.mxu0 %v424
      %560 = vmatprep.subr.bf16.mxu0 %v429
      %561 = vmatpush1.bf16.msra.mxu0 %v428
      %562 = vmatprep.subr.bf16.mxu0 %v433
      %563 = vmatpush1.bf16.msra.mxu0 %v432
      %564 = vmatprep.subr.bf16.mxu0 %v437
      %565 = vmatpush1.bf16.msra.mxu0 %v436
      %566 = vmatprep.subr.bf16.mxu0 %v441
      %567 = vmatpush1.bf16.msra.mxu0 %v440
      %568 = vmatprep.subr.bf16.mxu0 %v445
      %569 = vmatpush1.bf16.msra.mxu0 %v444
      %570 = vmatprep.subr.bf16.mxu0 %v449
      %571 = vmatpush1.bf16.msra.mxu0 %v448
      %572 = vmatprep.subr.bf16.mxu0 %v453
      %573 = vmatpush1.bf16.msra.mxu0 %v452
      %574 = vmatprep.subr.bf16.mxu0 %v457
      %575 = vmatpush1.bf16.msra.mxu0 %v456
      %576 = vmatprep.subr.bf16.mxu0 %v513
      %577 = vmatpush1.bf16.msra.mxu0 %v510
      %578 = vmatprep.subr.bf16.mxu0 0
      %579 = vmatpush1.bf16.msra.mxu0 0
      %580 = vmatprep.subr.bf16.mxu0 0
      %581 = vmatpush1.bf16.msra.mxu0 0
      %582 = vmatprep.subr.bf16.mxu0 0
      %583 = vmatpush1.bf16.msra.mxu0 0
      %584 = vmatprep.subr.bf16.mxu0 0
      %585 = vmatpush1.bf16.msra.mxu0 0
      %586 = vmatprep.subr.bf16.mxu0 0
      %587 = vmatpush1.bf16.msra.mxu0 0
      %588 = vmatprep.subr.bf16.mxu0 0
      %589 = vmatpush1.bf16.msra.mxu0 0
      %590 = vmatprep.mubr.bf16.mxu0 %v500
      %591 = vmatmul.mubr.bf16.gmra.mrb[0].mxu0 %v305
      %v592 = vpop.f32.mrb[0].mxu0
      %v593 = vadd.f32 0.0, %v592
      %v594 = vpop.f32.mrb[0].mxu0
      %v595 = vadd.f32 0.0, %v594
      %v596 = vpop.f32.mrb[0].mxu0
      %v597 = vadd.f32 0.0, %v596
      %v598 = vpop.f32.mrb[0].mxu0
      %v599 = vadd.f32 0.0, %v598
      %600 = vdwg.mxu0
      %v601 = vadd.f32 %v550, %v552
      %v602 = vadd.f32 %v601, %v593
      %v603 = vadd.f32 %v602, %v595
      %604 = vadd.xlane.f32.xlu0 %v603
      %v605 = vpop.xlane.xlu0 %604
      %v606 = vadd.f32 %v554, %v556
      %v607 = vadd.f32 %v606, %v597
      %v608 = vadd.f32 %v607, %v599
      %609 = vadd.xlane.f32.xlu0 %v608
      %v610 = vpop.xlane.xlu0 %609
      %v611 = vsel %vm234, %v605, 0.0
      %v612 = vsel %vm234, %v610, 0.0
      %v613 = vadd.f32 %v611, %v612
      %614 = vadd.xlane.f32.xlu0 %v613
      %v615 = vpop.xlane.xlu0 %614
      %v616 = vrot.slane %v615, 4
      %v617 = vadd.f32 %v615, %v616
      %v618 = vrot.slane %v617, 2
      %v619 = vadd.f32 %v617, %v618
      %v620 = vrot.slane %v619, 1
      %v621 = vadd.f32 %v619, %v620
      %s622 = vtos %v621
      %s623 = smul.f32 %s246, 100.0
      %s624 = sadd.f32 %s622, %s623
      %v625 = vmul.f32 %v550, %v550
      %v626 = vmul.f32 %v552, %v552
      %v627 = vmul.f32 %v593, %v593
      %v628 = vmul.f32 %v595, %v595
      %v629 = vmul.f32 %v554, %v554
      %v630 = vmul.f32 %v556, %v556
      %v631 = vmul.f32 %v597, %v597
      %v632 = vmul.f32 %v599, %v599
      %v633 = vadd.f32 %v625, %v626
      %v634 = vadd.f32 %v633, %v627
      %v635 = vadd.f32 %v634, %v628
      %v636 = vadd.f32 %v635, %v629
      %v637 = vadd.f32 %v636, %v630
      %v638 = vadd.f32 %v637, %v631
      %v639 = vadd.f32 %v638, %v632
      %640 = vadd.xlane.f32.xlu0 %v639
      %v641 = vpop.xlane.xlu0 %640
      %v642 = vrot.slane %v641, 4
      %v643 = vadd.f32 %v641, %v642
      %v644 = vrot.slane %v643, 2
      %v645 = vadd.f32 %v643, %v644
      %v646 = vrot.slane %v645, 1
      %v647 = vadd.f32 %v645, %v646
      %s648 = vtos %v647
      %v649 = vmul.f32 %v228, %v605
      %v650 = vmul.f32 %v229, %v610
      %v651 = vsel %vm234, %v649, 0.0
      %v652 = vsel %vm234, %v650, 0.0
      %v653 = vadd.f32 %v651, %v652
      %654 = vadd.xlane.f32.xlu0 %v653
      %v655 = vpop.xlane.xlu0 %654
      %v656 = vrot.slane %v655, 4
      %v657 = vadd.f32 %v655, %v656
      %v658 = vrot.slane %v657, 2
      %v659 = vadd.f32 %v657, %v658
      %v660 = vrot.slane %v659, 1
      %v661 = vadd.f32 %v659, %v660
      %s662 = vtos %v661
      %s663 = smul.f32 %s662, 2.0
      %s664 = sadd.f32 %s648, %s663
      %s665 = smul.f32 %s260, 100.0
      %s666 = sadd.f32 %s664, %s665
      %s667 = smul.f32 %s624, 0.000625
      %s668 = smul.f32 %s666, 0.000625
      %s669 = smul.f32 %s667, %s667
      %s670 = ssub.f32 %s668, %s669
      %s671 = sadd.f32 %s670, 1e-05
      %v672 = vstv %s671
      %v673 = vrsqrt.pop %v672
      %s674 = vtos %v673
      %v675 = vstv %s674
      %v676 = vmul.f32 %v675, %v230
      %v677 = vmul.f32 %v675, %v231
      %v678 = vstv %s667
      %v679 = vsub.f32 %v228, %v678
      %v680 = vsub.f32 %v229, %v678
      %v681 = vmul.f32 %v679, %v675
      %v682 = vmul.f32 %v680, %v675
      %v683 = vmul.f32 %v681, %v230
      %v684 = vmul.f32 %v682, %v231
      %v685 = vadd.f32 %v683, %v232
      %v686 = vadd.f32 %v684, %v233
      %688 = vset.pattern.permute.xlu0 0
      %689 = vperm.xlu0 %688, %v676
      %v690 = vpop.permute.xlu0 %689
      %693 = vset.pattern.permute.xlu0 0
      %694 = vperm.xlu0 %693, %v677
      %v695 = vpop.permute.xlu0 %694
      %v697 = vmul.f32 %v550, %v690
      %v698 = vmul.f32 %v552, %v690
      %v699 = vmul.f32 %v593, %v690
      %v700 = vmul.f32 %v595, %v690
      %v701 = vmul.f32 %v554, %v695
      %v702 = vmul.f32 %v556, %v695
      %v703 = vmul.f32 %v597, %v695
      %v704 = vmul.f32 %v599, %v695
      %706 = vset.pattern.permute.xlu0 0
      %707 = vperm.xlu0 %706, %v685
      %v708 = vpop.permute.xlu0 %707
      %711 = vset.pattern.permute.xlu0 0
      %712 = vperm.xlu0 %711, %v686
      %v713 = vpop.permute.xlu0 %712
      %v715 = vadd.f32 %v697, %v708
      %v716 = vadd.f32 %v698, %v708
      %v717 = vadd.f32 %v699, %v708
      %v718 = vadd.f32 %v700, %v708
      %v719 = vadd.f32 %v701, %v713
      %v720 = vadd.f32 %v702, %v713
      %v721 = vadd.f32 %v703, %v713
      %v722 = vadd.f32 %v704, %v713
      %v723 = vmax.f32 %v715, 0.0
      %v724 = vmax.f32 %v716, 0.0
      %v725 = vmax.f32 %v717, 0.0
      %v726 = vmax.f32 %v718, 0.0
      %v727 = vmax.f32 %v719, 0.0
      %v728 = vmax.f32 %v720, 0.0
      %v729 = vmax.f32 %v721, 0.0
      %v730 = vmax.f32 %v722, 0.0
      %v731 = vmax.f32 %v723, %v724
      %v732 = vmax.f32 %v727, %v728
      %v733 = vmax.f32 %v725, %v726
      %v734 = vmax.f32 %v729, %v730
      %v735 = vmax.f32 %v731, %v733
      %v736 = vmax.f32 %v732, %v734
      %737 = vst [vmem:[%s224] sm:$0xff] %v735
      %738 = vst [vmem:[%s224 + $0x8] sm:$0xff] %v736
      %p739 = scmp.lt.s32.totalorder %s16, 1
      %s740 = scalar_select %p739, %s16, 1
      %s741 = smul.addr %s740, 2
      %s742 = smul.addr %s741, 8
      %s743 = scalar_lea.vmem %s5, %s742
      // Predicated region
      $region41: #{f.4} parent=39 // pred_check
        %p744 = pneg %p144
      $region42: #{f.4} parent=39 // pred_check_branch
        %746 = sbr.rel (%p744) target = $region44
      $region43: #{f.4} parent=39 // pred_region
        _
      $region44: #{f.4} parent=39 // pred_fallthru
        _
    $region40: #{f.4} parent=5 // pred_fallthru
      _
    %p747 = scmp.le.s32.totalorder 2, %s11
    // Predicated region
    $region45: #{f.4} parent=5 // pred_check
      %p748 = pneg %p747
    $region46: #{f.4} parent=5 // pred_check_branch
      %750 = sbr.rel (%p748) target = $region48
    $region47: #{f.4} parent=5 // pred_region
      %s751 = ssub.s32 %s11, 2
      // Predicated region
      $region49: #{f.4} parent=47 // pred_check
        %p752 = pneg %p150
      $region50: #{f.4} parent=47 // pred_check_branch
        %754 = sbr.rel (%p752) target = $region52
      $region51: #{f.4} parent=47 // pred_region
        %p755 = scmp.lt.s32.totalorder %s17, 1
        %s756 = scalar_select %p755, %s17, 1
        %s757 = smul.addr %s756, 2
        %s758 = smul.addr %s757, 8
        %s759 = scalar_lea.vmem %s5, %s758
      $region52: #{f.4} parent=47 // pred_fallthru
        _
    $region48: #{f.4} parent=5 // pred_fallthru
      _
  $region6: #{f.4} parent=0 // loop_footer
    %s15 = sadd.s32 1, %s11
  $region7: #{f.4} parent=0 // loop_footer_branch
    %10 = sbr.rel target = $region3
  $region8: #{f.4} parent=0 // loop_exit
    _

// kernel: f.5
$region0: #{f.5}
  #allocation0 [shape = 'u32[]', space=smem, size = 0x4, offset = 0x4, fixed_abs, tag = 'smem constant byte address 0x4 - core index']
  #allocation1 [shape = 'u32[144,128]{1,0:T(1,128)}', space=vmem, size = 0x12000, scoped, tag = 'internal scratch']
  %s0 = inlined_call_operand.vmem [shape: f32[2,400], index: 0, kind: input, shape index: {}]
  %s1 = inlined_call_operand.vmem [shape: f32[400,128], index: 1, kind: input, shape index: {}]
  %s2 = inlined_call_operand.vmem [shape: f32[1,128], index: 2, kind: input, shape index: {}]
  %s3 = inlined_call_operand.vmem [shape: f32[128,128], index: 3, kind: input, shape index: {}]
  %s4 = inlined_call_operand.vmem [shape: f32[1,128], index: 4, kind: input, shape index: {}]
  %s5 = inlined_call_operand.vmem [shape: f32[128,128], index: 5, kind: input, shape index: {}]
  %s6 = inlined_call_operand.vmem [shape: f32[1,128], index: 6, kind: input, shape index: {}]
  %s7 = inlined_call_operand.hbm [shape: f32[2,128], index: 7, kind: output, shape index: {}]
  %s8 = sld [smem:[#allocation0]]
  $region38: #{f.5} parent=0
    _
  %s10 = ssub.s32 1, %s8
  %s11 = scalar_select 0, %s10, %s8
  $region1: #{f.5} parent=0
    #allocation2 [shape = 'u8[1024]{0}', space=vmem, size = 0x400, scoped, tag = 'output window, operand 0, single buffered']
    #allocation3 [shape = 's32[1]{0}', space=sflag, size = 0x4, scoped, tag = 'scoped memory for f.5']
    %12 = vsyncpa [#allocation3], 0
    // Predicated region
    $region2: #{f.5} parent=1 // pred_check
      _
    $region3: #{f.5} parent=1 // pred_check_branch
      %14 = sbr.rel (0) target = $region5
    $region4: #{f.5} parent=1 // pred_region
      _
    $region5: #{f.5} parent=1 // pred_fallthru
      _
    // Predicated region
    $region6: #{f.5} parent=1 // pred_check
      _
    $region7: #{f.5} parent=1 // pred_check_branch
      %16 = sbr.rel (0) target = $region9
    $region8: #{f.5} parent=1 // pred_region
      _
    $region9: #{f.5} parent=1 // pred_fallthru
      _
    // Predicated region
    $region10: #{f.5} parent=1 // pred_check
      _
    $region11: #{f.5} parent=1 // pred_check_branch
      %18 = sbr.rel (0) target = $region13
    $region12: #{f.5} parent=1 // pred_region
      _
    $region13: #{f.5} parent=1 // pred_fallthru
      _
    // Predicated region
    $region14: #{f.5} parent=1 // pred_check
      _
    $region15: #{f.5} parent=1 // pred_check_branch
      %20 = sbr.rel (0) target = $region17
    $region16: #{f.5} parent=1 // pred_region
      _
    $region17: #{f.5} parent=1 // pred_fallthru
      _
    // Predicated region
    $region18: #{f.5} parent=1 // pred_check
      _
    $region19: #{f.5} parent=1 // pred_check_branch
      %22 = sbr.rel (0) target = $region21
    $region20: #{f.5} parent=1 // pred_region
      _
    $region21: #{f.5} parent=1 // pred_fallthru
      _
    // Predicated region
    $region22: #{f.5} parent=1 // pred_check
      _
    $region23: #{f.5} parent=1 // pred_check_branch
      %24 = sbr.rel (0) target = $region25
    $region24: #{f.5} parent=1 // pred_region
      _
    $region25: #{f.5} parent=1 // pred_fallthru
      _
    // Predicated region
    $region26: #{f.5} parent=1 // pred_check
      _
    $region27: #{f.5} parent=1 // pred_check_branch
      %26 = sbr.rel (0) target = $region29
    $region28: #{f.5} parent=1 // pred_region
      _
    $region29: #{f.5} parent=1 // pred_fallthru
      _
    %v27 = vld [vmem:[%s0] sm:$0xff]
    %v28 = vld [vmem:[%s1] sm:$0xff]
    %v29 = vld [vmem:[%s1 + $0x8] sm:$0xff]
    %v30 = vld [vmem:[%s1 + $0x10] sm:$0xff]
    %v31 = vld [vmem:[%s1 + $0x18] sm:$0xff]
    %v32 = vld [vmem:[%s1 + $0x20] sm:$0xff]
    %v33 = vld [vmem:[%s1 + $0x28] sm:$0xff]
    %v34 = vld [vmem:[%s1 + $0x30] sm:$0xff]
    %v35 = vld [vmem:[%s1 + $0x38] sm:$0xff]
    %v36 = vld [vmem:[%s1 + $0x40] sm:$0xff]
    %v37 = vld [vmem:[%s1 + $0x48] sm:$0xff]
    %v38 = vld [vmem:[%s1 + $0x50] sm:$0xff]
    %v39 = vld [vmem:[%s1 + $0x58] sm:$0xff]
    %v40 = vld [vmem:[%s1 + $0x60] sm:$0xff]
    %v41 = vld [vmem:[%s1 + $0x68] sm:$0xff]
    %v42 = vld [vmem:[%s1 + $0x70] sm:$0xff]
    %v43 = vld [vmem:[%s1 + $0x78] sm:$0xff]
    %v44 = vld [vmem:[%s1 + $0x80] sm:$0xff]
    %v45 = vld [vmem:[%s1 + $0x88] sm:$0xff]
    %v46 = vld [vmem:[%s1 + $0x90] sm:$0xff]
    %v47 = vld [vmem:[%s1 + $0x98] sm:$0xff]
    %v48 = vld [vmem:[%s1 + $0xa0] sm:$0xff]
    %v49 = vld [vmem:[%s1 + $0xa8] sm:$0xff]
    %v50 = vld [vmem:[%s1 + $0xb0] sm:$0xff]
    %v51 = vld [vmem:[%s1 + $0xb8] sm:$0xff]
    %v52 = vld [vmem:[%s1 + $0xc0] sm:$0xff]
    %v53 = vld [vmem:[%s1 + $0xc8] sm:$0xff]
    %v54 = vld [vmem:[%s1 + $0xd0] sm:$0xff]
    %v55 = vld [vmem:[%s1 + $0xd8] sm:$0xff]
    %v56 = vld [vmem:[%s1 + $0xe0] sm:$0xff]
    %v57 = vld [vmem:[%s1 + $0xe8] sm:$0xff]
    %v58 = vld [vmem:[%s1 + $0xf0] sm:$0xff]
    %v59 = vld [vmem:[%s1 + $0xf8] sm:$0xff]
    %v60 = vld [vmem:[%s1 + $0x100] sm:$0xff]
    %v61 = vld [vmem:[%s1 + $0x108] sm:$0xff]
    %v62 = vld [vmem:[%s1 + $0x110] sm:$0xff]
    %v63 = vld [vmem:[%s1 + $0x118] sm:$0xff]
    %v64 = vld [vmem:[%s1 + $0x120] sm:$0xff]
    %v65 = vld [vmem:[%s1 + $0x128] sm:$0xff]
    %v66 = vld [vmem:[%s1 + $0x130] sm:$0xff]
    %v67 = vld [vmem:[%s1 + $0x138] sm:$0xff]
    %v68 = vld [vmem:[%s1 + $0x140] sm:$0xff]
    %v69 = vld [vmem:[%s1 + $0x148] sm:$0xff]
    %v70 = vld [vmem:[%s1 + $0x150] sm:$0xff]
    %v71 = vld [vmem:[%s1 + $0x158] sm:$0xff]
    %v72 = vld [vmem:[%s1 + $0x160] sm:$0xff]
    %v73 = vld [vmem:[%s1 + $0x168] sm:$0xff]
    %v74 = vld [vmem:[%s1 + $0x170] sm:$0xff]
    %v75 = vld [vmem:[%s1 + $0x178] sm:$0xff]
    %v76 = vld [vmem:[%s1 + $0x180] sm:$0xff]
    %v77 = vld [vmem:[%s1 + $0x188] sm:$0xff]
    %v78 = vld [vmem:[%s2] sm:$0x1]
    %v80 = vlaneseq
    %v81 = vshrl.u32 %v80, 7
    %v82 = vsub.s32 0, %v81
    %v83 = vrot.slane %v78, %v82
    %v86 = vcombine.high %v27, %v27
    %v88 = vunpack.c.l.s4 1983009808
    %v89 = vunpack.c.0.s8 %v88
    %v90 = vlaneseq
    %v91 = vshrl.u32 %v90, 7
    %v92 = vsub.s32 %v89, %v91
    %v93 = vrot.slane %v27, %v92
    %v95 = vunpack.c.l.s4 1983009808
    %v96 = vunpack.c.0.s8 %v95
    %v97 = vlaneseq
    %v98 = vshrl.u32 %v97, 7
    %v99 = vsub.s32 %v96, %v98
    %v100 = vrot.slane %v86, %v99
    %v101 = vcombine.high %v93, %v93
    %v102 = vcombine.high %v100, %v100
    %vm106 = vcmask 130048
    %v107 = vsel %vm106, %v102, 0
    %109 = vmatprep.subr.mxu0 0.0
    %110 = vmatpush1.msra.mxu0 %v28
    %111 = vmatprep.subr.mxu0 0.0
    %112 = vmatpush1.msra.mxu0 %v29
    %113 = vmatprep.subr.mxu0 0.0
    %114 = vmatpush1.msra.mxu0 %v30
    %115 = vmatprep.subr.mxu0 0.0
    %116 = vmatpush1.msra.mxu0 %v31
    %117 = vmatprep.subr.mxu0 0.0
    %118 = vmatpush1.msra.mxu0 %v32
    %119 = vmatprep.subr.mxu0 0.0
    %120 = vmatpush1.msra.mxu0 %v33
    %121 = vmatprep.subr.mxu0 0.0
    %122 = vmatpush1.msra.mxu0 %v34
    %123 = vmatprep.subr.mxu0 0.0
    %124 = vmatpush1.msra.mxu0 %v35
    %125 = vmatprep.subr.mxu0 0.0
    %126 = vmatpush1.msra.mxu0 %v36
    %127 = vmatprep.subr.mxu0 0.0
    %128 = vmatpush1.msra.mxu0 %v37
    %129 = vmatprep.subr.mxu0 0.0
    %130 = vmatpush1.msra.mxu0 %v38
    %131 = vmatprep.subr.mxu0 0.0
    %132 = vmatpush1.msra.mxu0 %v39
    %133 = vmatprep.subr.mxu0 0.0
    %134 = vmatpush1.msra.mxu0 %v40
    %135 = vmatprep.subr.mxu0 0.0
    %136 = vmatpush1.msra.mxu0 %v41
    %137 = vmatprep.subr.mxu0 0.0
    %138 = vmatpush1.msra.mxu0 %v42
    %139 = vmatprep.subr.mxu0 0.0
    %140 = vmatpush1.msra.mxu0 %v43
    %141 = vmatprep.subr.mxu0 0.0
    %142 = vmatpush1.msra.mxu0 %v44
    %143 = vmatprep.subr.mxu0 0.0
    %144 = vmatpush1.msra.mxu0 %v45
    %145 = vmatprep.subr.mxu0 0.0
    %146 = vmatpush1.msra.mxu0 %v46
    %147 = vmatprep.subr.mxu0 0.0
    %148 = vmatpush1.msra.mxu0 %v47
    %149 = vmatprep.subr.mxu0 0.0
    %150 = vmatpush1.msra.mxu0 %v48
    %151 = vmatprep.subr.mxu0 0.0
    %152 = vmatpush1.msra.mxu0 %v49
    %153 = vmatprep.subr.mxu0 0.0
    %154 = vmatpush1.msra.mxu0 %v50
    %155 = vmatprep.subr.mxu0 0.0
    %156 = vmatpush1.msra.mxu0 %v51
    %157 = vmatprep.subr.mxu0 0.0
    %158 = vmatpush1.msra.mxu0 %v52
    %159 = vmatprep.subr.mxu0 0.0
    %160 = vmatpush1.msra.mxu0 %v53
    %161 = vmatprep.subr.mxu0 0.0
    %162 = vmatpush1.msra.mxu0 %v54
    %163 = vmatprep.subr.mxu0 0.0
    %164 = vmatpush1.msra.mxu0 %v55
    %165 = vmatprep.subr.mxu0 0.0
    %166 = vmatpush1.msra.mxu0 %v56
    %167 = vmatprep.subr.mxu0 0.0
    %168 = vmatpush1.msra.mxu0 %v57
    %169 = vmatprep.subr.mxu0 0.0
    %170 = vmatpush1.msra.mxu0 %v58
    %171 = vmatprep.subr.mxu0 0.0
    %172 = vmatpush1.msra.mxu0 %v59
    %173 = vmatprep.mubr.f32.mxu0 %v101
    %174 = vmatmul.mubr.f32.gmra.mrb[0].mxu0 %v93
    %v175 = vpop.f32.mrb[0].mxu0
    %v176 = vadd.f32 %v83, %v175
    %v177 = vpop.f32.mrb[0].mxu0
    %178 = vdwg.mxu0
    %179 = vmatprep.subr.mxu0 0.0
    %180 = vmatpush1.msra.mxu0 %v60
    %181 = vmatprep.subr.mxu0 0.0
    %182 = vmatpush1.msra.mxu0 %v61
    %183 = vmatprep.subr.mxu0 0.0
    %184 = vmatpush1.msra.mxu0 %v62
    %185 = vmatprep.subr.mxu0 0.0
    %186 = vmatpush1.msra.mxu0 %v63
    %187 = vmatprep.subr.mxu0 0.0
    %188 = vmatpush1.msra.mxu0 %v64
    %189 = vmatprep.subr.mxu0 0.0
    %190 = vmatpush1.msra.mxu0 %v65
    %191 = vmatprep.subr.mxu0 0.0
    %192 = vmatpush1.msra.mxu0 %v66
    %193 = vmatprep.subr.mxu0 0.0
    %194 = vmatpush1.msra.mxu0 %v67
    %195 = vmatprep.subr.mxu0 0.0
    %196 = vmatpush1.msra.mxu0 %v68
    %197 = vmatprep.subr.mxu0 0.0
    %198 = vmatpush1.msra.mxu0 %v69
    %199 = vmatprep.subr.mxu0 0.0
    %200 = vmatpush1.msra.mxu0 %v70
    %201 = vmatprep.subr.mxu0 0.0
    %202 = vmatpush1.msra.mxu0 %v71
    %203 = vmatprep.subr.mxu0 0.0
    %204 = vmatpush1.msra.mxu0 %v72
    %205 = vmatprep.subr.mxu0 0.0
    %206 = vmatpush1.msra.mxu0 %v73
    %207 = vmatprep.subr.mxu0 0.0
    %208 = vmatpush1.msra.mxu0 %v74
    %209 = vmatprep.subr.mxu0 0.0
    %210 = vmatpush1.msra.mxu0 %v75
    %211 = vmatprep.subr.mxu0 0.0
    %212 = vmatpush1.msra.mxu0 %v76
    %213 = vmatprep.subr.mxu0 0.0
    %214 = vmatpush1.msra.mxu0 %v77
    %215 = vmatprep.subr.mxu0 0.0
    %216 = vmatpush1.msra.mxu0 0.0
    %217 = vmatprep.subr.mxu0 0.0
    %218 = vmatpush1.msra.mxu0 0.0
    %219 = vmatprep.subr.mxu0 0.0
    %220 = vmatpush1.msra.mxu0 0.0
    %221 = vmatprep.subr.mxu0 0.0
    %222 = vmatpush1.msra.mxu0 0.0
    %223 = vmatprep.subr.mxu0 0.0
    %224 = vmatpush1.msra.mxu0 0.0
    %225 = vmatprep.subr.mxu0 0.0
    %226 = vmatpush1.msra.mxu0 0.0
    %227 = vmatprep.subr.mxu0 0.0
    %228 = vmatpush1.msra.mxu0 0.0
    %229 = vmatprep.subr.mxu0 0.0
    %230 = vmatpush1.msra.mxu0 0.0
    %231 = vmatprep.subr.mxu0 0.0
    %232 = vmatpush1.msra.mxu0 0.0
    %233 = vmatprep.subr.mxu0 0.0
    %234 = vmatpush1.msra.mxu0 0.0
    %235 = vmatprep.subr.mxu0 0.0
    %236 = vmatpush1.msra.mxu0 0.0
    %237 = vmatprep.subr.mxu0 0.0
    %238 = vmatpush1.msra.mxu0 0.0
    %239 = vmatprep.subr.mxu0 0.0
    %240 = vmatpush1.msra.mxu0 0.0
    %241 = vmatprep.subr.mxu0 0.0
    %242 = vmatpush1.msra.mxu0 0.0
    %243 = vmatprep.mubr.f32.mxu0 %v107
    %244 = vmatmul.mubr.f32.gmra.mrb[0].mxu0 %v100
    %v245 = vpop.f32.mrb[0].mxu0
    %v246 = vadd.f32 %v176, %v245
    %v247 = vpop.f32.mrb[0].mxu0
    %248 = vdwg.mxu0
    %v249 = vmax.f32 %v246, 0.0
    %v250 = vld [vmem:[%s3] sm:$0xff]
    %v251 = vld [vmem:[%s3 + $0x8] sm:$0xff]
    %v252 = vld [vmem:[%s3 + $0x10] sm:$0xff]
    %v253 = vld [vmem:[%s3 + $0x18] sm:$0xff]
    %v254 = vld [vmem:[%s3 + $0x20] sm:$0xff]
    %v255 = vld [vmem:[%s3 + $0x28] sm:$0xff]
    %v256 = vld [vmem:[%s3 + $0x30] sm:$0xff]
    %v257 = vld [vmem:[%s3 + $0x38] sm:$0xff]
    %v258 = vld [vmem:[%s3 + $0x40] sm:$0xff]
    %v259 = vld [vmem:[%s3 + $0x48] sm:$0xff]
    %v260 = vld [vmem:[%s3 + $0x50] sm:$0xff]
    %v261 = vld [vmem:[%s3 + $0x58] sm:$0xff]
    %v262 = vld [vmem:[%s3 + $0x60] sm:$0xff]
    %v263 = vld [vmem:[%s3 + $0x68] sm:$0xff]
    %v264 = vld [vmem:[%s3 + $0x70] sm:$0xff]
    %v265 = vld [vmem:[%s3 + $0x78] sm:$0xff]
    %v266 = vld [vmem:[%s4] sm:$0x1]
    %v268 = vlaneseq
    %v269 = vshrl.u32 %v268, 7
    %v270 = vsub.s32 0, %v269
    %v271 = vrot.slane %v266, %v270
    %273 = vmatprep.subr.mxu0 0.0
    %274 = vmatpush1.msra.mxu0 %v250
    %275 = vmatprep.subr.mxu0 0.0
    %276 = vmatpush1.msra.mxu0 %v251
    %277 = vmatprep.subr.mxu0 0.0
    %278 = vmatpush1.msra.mxu0 %v252
    %279 = vmatprep.subr.mxu0 0.0
    %280 = vmatpush1.msra.mxu0 %v253
    %281 = vmatprep.subr.mxu0 0.0
    %282 = vmatpush1.msra.mxu0 %v254
    %283 = vmatprep.subr.mxu0 0.0
    %284 = vmatpush1.msra.mxu0 %v255
    %285 = vmatprep.subr.mxu0 0.0
    %286 = vmatpush1.msra.mxu0 %v256
    %287 = vmatprep.subr.mxu0 0.0
    %288 = vmatpush1.msra.mxu0 %v257
    %289 = vmatprep.subr.mxu0 0.0
    %290 = vmatpush1.msra.mxu0 %v258
    %291 = vmatprep.subr.mxu0 0.0
    %292 = vmatpush1.msra.mxu0 %v259
    %293 = vmatprep.subr.mxu0 0.0
    %294 = vmatpush1.msra.mxu0 %v260
    %295 = vmatprep.subr.mxu0 0.0
    %296 = vmatpush1.msra.mxu0 %v261
    %297 = vmatprep.subr.mxu0 0.0
    %298 = vmatpush1.msra.mxu0 %v262
    %299 = vmatprep.subr.mxu0 0.0
    %300 = vmatpush1.msra.mxu0 %v263
    %301 = vmatprep.subr.mxu0 0.0
    %302 = vmatpush1.msra.mxu0 %v264
    %303 = vmatprep.subr.mxu0 0.0
    %304 = vmatpush1.msra.mxu0 %v265
    %305 = vmatprep.subr.mxu0 0.0
    %306 = vmatpush1.msra.mxu0 0.0
    %307 = vmatprep.subr.mxu0 0.0
    %308 = vmatpush1.msra.mxu0 0.0
    %309 = vmatprep.subr.mxu0 0.0
    %310 = vmatpush1.msra.mxu0 0.0
    %311 = vmatprep.subr.mxu0 0.0
    %312 = vmatpush1.msra.mxu0 0.0
    %313 = vmatprep.subr.mxu0 0.0
    %314 = vmatpush1.msra.mxu0 0.0
    %315 = vmatprep.subr.mxu0 0.0
    %316 = vmatpush1.msra.mxu0 0.0
    %317 = vmatprep.subr.mxu0 0.0
    %318 = vmatpush1.msra.mxu0 0.0
    %319 = vmatprep.subr.mxu0 0.0
    %320 = vmatpush1.msra.mxu0 0.0
    %321 = vmatprep.subr.mxu0 0.0
    %322 = vmatpush1.msra.mxu0 0.0
    %323 = vmatprep.subr.mxu0 0.0
    %324 = vmatpush1.msra.mxu0 0.0
    %325 = vmatprep.subr.mxu0 0.0
    %326 = vmatpush1.msra.mxu0 0.0
    %327 = vmatprep.subr.mxu0 0.0
    %328 = vmatpush1.msra.mxu0 0.0
    %329 = vmatprep.subr.mxu0 0.0
    %330 = vmatpush1.msra.mxu0 0.0
    %331 = vmatprep.subr.mxu0 0.0
    %332 = vmatpush1.msra.mxu0 0.0
    %333 = vmatprep.subr.mxu0 0.0
    %334 = vmatpush1.msra.mxu0 0.0
    %335 = vmatprep.subr.mxu0 0.0
    %336 = vmatpush1.msra.mxu0 0.0
    %337 = vmatprep.mubr.f32.mxu0 0.0
    %338 = vmatmul.mubr.f32.gmra.mrb[0].mxu0 %v249
    %v339 = vpop.f32.mrb[0].mxu0
    %v340 = vadd.f32 %v271, %v339
    %v341 = vpop.f32.mrb[0].mxu0
    %342 = vdwg.mxu0
    %v343 = vmax.f32 %v340, 0.0
    %v344 = vld [vmem:[%s5] sm:$0xff]
    %v345 = vld [vmem:[%s5 + $0x8] sm:$0xff]
    %v346 = vld [vmem:[%s5 + $0x10] sm:$0xff]
    %v347 = vld [vmem:[%s5 + $0x18] sm:$0xff]
    %v348 = vld [vmem:[%s5 + $0x20] sm:$0xff]
    %v349 = vld [vmem:[%s5 + $0x28] sm:$0xff]
    %v350 = vld [vmem:[%s5 + $0x30] sm:$0xff]
    %v351 = vld [vmem:[%s5 + $0x38] sm:$0xff]
    %v352 = vld [vmem:[%s5 + $0x40] sm:$0xff]
    %v353 = vld [vmem:[%s5 + $0x48] sm:$0xff]
    %v354 = vld [vmem:[%s5 + $0x50] sm:$0xff]
    %v355 = vld [vmem:[%s5 + $0x58] sm:$0xff]
    %v356 = vld [vmem:[%s5 + $0x60] sm:$0xff]
    %v357 = vld [vmem:[%s5 + $0x68] sm:$0xff]
    %v358 = vld [vmem:[%s5 + $0x70] sm:$0xff]
    %v359 = vld [vmem:[%s5 + $0x78] sm:$0xff]
    %v360 = vld [vmem:[%s6] sm:$0x1]
    %v362 = vlaneseq
    %v363 = vshrl.u32 %v362, 7
    %v364 = vsub.s32 0, %v363
    %v365 = vrot.slane %v360, %v364
    %367 = vmatprep.subr.mxu0 0.0
    %368 = vmatpush1.msra.mxu0 %v344
    %369 = vmatprep.subr.mxu0 0.0
    %370 = vmatpush1.msra.mxu0 %v345
    %371 = vmatprep.subr.mxu0 0.0
    %372 = vmatpush1.msra.mxu0 %v346
    %373 = vmatprep.subr.mxu0 0.0
    %374 = vmatpush1.msra.mxu0 %v347
    %375 = vmatprep.subr.mxu0 0.0
    %376 = vmatpush1.msra.mxu0 %v348
    %377 = vmatprep.subr.mxu0 0.0
    %378 = vmatpush1.msra.mxu0 %v349
    %379 = vmatprep.subr.mxu0 0.0
    %380 = vmatpush1.msra.mxu0 %v350
    %381 = vmatprep.subr.mxu0 0.0
    %382 = vmatpush1.msra.mxu0 %v351
    %383 = vmatprep.subr.mxu0 0.0
    %384 = vmatpush1.msra.mxu0 %v352
    %385 = vmatprep.subr.mxu0 0.0
    %386 = vmatpush1.msra.mxu0 %v353
    %387 = vmatprep.subr.mxu0 0.0
    %388 = vmatpush1.msra.mxu0 %v354
    %389 = vmatprep.subr.mxu0 0.0
    %390 = vmatpush1.msra.mxu0 %v355
    %391 = vmatprep.subr.mxu0 0.0
    %392 = vmatpush1.msra.mxu0 %v356
    %393 = vmatprep.subr.mxu0 0.0
    %394 = vmatpush1.msra.mxu0 %v357
    %395 = vmatprep.subr.mxu0 0.0
    %396 = vmatpush1.msra.mxu0 %v358
    %397 = vmatprep.subr.mxu0 0.0
    %398 = vmatpush1.msra.mxu0 %v359
    %399 = vmatprep.subr.mxu0 0.0
    %400 = vmatpush1.msra.mxu0 0.0
    %401 = vmatprep.subr.mxu0 0.0
    %402 = vmatpush1.msra.mxu0 0.0
    %403 = vmatprep.subr.mxu0 0.0
    %404 = vmatpush1.msra.mxu0 0.0
    %405 = vmatprep.subr.mxu0 0.0
    %406 = vmatpush1.msra.mxu0 0.0
    %407 = vmatprep.subr.mxu0 0.0
    %408 = vmatpush1.msra.mxu0 0.0
    %409 = vmatprep.subr.mxu0 0.0
    %410 = vmatpush1.msra.mxu0 0.0
    %411 = vmatprep.subr.mxu0 0.0
    %412 = vmatpush1.msra.mxu0 0.0
    %413 = vmatprep.subr.mxu0 0.0
    %414 = vmatpush1.msra.mxu0 0.0
    %415 = vmatprep.subr.mxu0 0.0
    %416 = vmatpush1.msra.mxu0 0.0
    %417 = vmatprep.subr.mxu0 0.0
    %418 = vmatpush1.msra.mxu0 0.0
    %419 = vmatprep.subr.mxu0 0.0
    %420 = vmatpush1.msra.mxu0 0.0
    %421 = vmatprep.subr.mxu0 0.0
    %422 = vmatpush1.msra.mxu0 0.0
    %423 = vmatprep.subr.mxu0 0.0
    %424 = vmatpush1.msra.mxu0 0.0
    %425 = vmatprep.subr.mxu0 0.0
    %426 = vmatpush1.msra.mxu0 0.0
    %427 = vmatprep.subr.mxu0 0.0
    %428 = vmatpush1.msra.mxu0 0.0
    %429 = vmatprep.subr.mxu0 0.0
    %430 = vmatpush1.msra.mxu0 0.0
    %431 = vmatprep.mubr.f32.mxu0 0.0
    %432 = vmatmul.mubr.f32.gmra.mrb[0].mxu0 %v343
    %v433 = vpop.f32.mrb[0].mxu0
    %v434 = vadd.f32 %v365, %v433
    %v435 = vpop.f32.mrb[0].mxu0
    %436 = vdwg.mxu0
    %437 = vst [vmem:[#allocation2] sm:$0x3] %v434
    // Predicated region
    $region30: #{f.5} parent=1 // pred_check
      _
    $region31: #{f.5} parent=1 // pred_check_branch
      %439 = sbr.rel (0) target = $region33
    $region32: #{f.5} parent=1 // pred_region
      %s441 = ssub.s32 32, 32
      %442 = vsyncadd [#allocation3], %s441
      %s444 = sshll.u32 [#allocation2], 4
      %s445 = int_to_ptr.vmem [resolvable:$true] %s444
      %447 = dma.vmem_to_hbm [thread:$0]  %s445, 32, %s7, [#allocation3]
    $region33: #{f.5} parent=1 // pred_fallthru
      _
    // Predicated region
    $region34: #{f.5} parent=1 // pred_check
      _
    $region35: #{f.5} parent=1 // pred_check_branch
      %449 = sbr.rel (0) target = $region37
    $region36: #{f.5} parent=1 // pred_region
      %450 = dma.done [#allocation3], 32
    $region37: #{f.5} parent=1 // pred_fallthru
      _
    %451 = vsyncpa [#allocation3], 1

</llo_original>
